<compile_context>
chip_gen: v7x
topology: tpu7x:2x2x1
jax: 0.10.0
libtpu: 0.0.40
codegen_flags: <defaults>
</compile_context>

<pallas_src>
import functools

import jax
import jax.numpy as jnp
from jax import lax
from jax.experimental import pallas as pl
from jax.experimental.pallas import tpu as pltpu


# ----------------------------------------------------------------------------
# Tiling helpers
# ----------------------------------------------------------------------------
def _physical_vmem_bytes():
    """Best-effort physical VMEM size; conservative (v7x-sized) fallback."""
    try:
        info = pltpu.get_tpu_info()
        for attr in ("vmem_capacity_bytes", "vmem_size_bytes", "vmem_bytes"):
            v = getattr(info, attr, None)
            if v:
                return int(v)
    except Exception:
        pass
    return 64 * 1024 * 1024


def _pick_tile_h(H, W, O, budget_bytes, batch):
    """Row tile TH (multiple of 8) sized from a per-block VMEM byte model:
       hash plane (u32, O octaves, double-buffered) + out block (double-
       buffered) + ~8 live f32 temporaries.  Prefers a divisor of H (no padded
       rows); otherwise the last block is padded and min/max masks pad rows."""
    if H <= 8:
        return H
    bytes_per_row = W * (8 * O + 40)
    cap = budget_bytes // max(bytes_per_row, 1)
    cap = min(cap, H, 2048)
    if batch == 1 and H >= 16:
        cap = min(cap, H // 2)           # >=2 row tiles so both v7x TCs get work
    cap = max(8, cap - (cap % 8))
    for th in range(cap, 7, -8):
        if H % th == 0:
            return th
    return cap                            # non-dividing: handled by masking


# ----------------------------------------------------------------------------
# Kernels
# ----------------------------------------------------------------------------
def _perlin_octaves_kernel(zf_ref, wz_ref, amp_ref, kf_ref, xy_ref, h_ref,
                           out_ref, min_ref, max_ref, *, full_h):
    """All octaves for one (batch, row-tile) block.

    Grid: (B, H//TH) -- both axes parallel.
      zf_ref  : SMEM (O, B)        f32    fractional z per (octave, batch)
      wz_ref  : SMEM (O, B)        f32    fade(zf)
      amp_ref : SMEM (O,)          f32    persistence**(o*(exponent+1))
      kf_ref  : SMEM (O,)          f32    frequency / scale per octave
      xy_ref  : SMEM (2,)          f32    [X offset, Y offset]
      h_ref   : VMEM (O,1,TH,W)    uint32 8 corner hashes packed 4 bits each
      out_ref : VMEM (1,TH,W)      f32    accumulated noise map
      min_ref : VMEM (1,1,8,128)   f32    per-block global min (splat)
      max_ref : VMEM (1,1,8,128)   f32    per-block global max (splat)
    """
    b = pl.program_id(0)
    hi = pl.program_id(1)

    n_oct = h_ref.shape[0]
    th = out_ref.shape[1]
    w = out_ref.shape[2]

    xoff = xy_ref[0]
    yoff = xy_ref[1]

    # Global pixel coordinates for this row tile (1-D; broadcast later).
    col = lax.broadcasted_iota(jnp.int32, (1, w), 1).astype(jnp.float32)       # (1, W)
    row = (lax.broadcasted_iota(jnp.int32, (th, 1), 0)
           + hi * th).astype(jnp.float32)                                      # (TH, 1)

    def fade(t):
        # 6t^5 - 15t^4 + 10t^3 (Horner form)
        return t * t * t * (t * (t * 6.0 - 15.0) + 10.0)

    def lerp(t, a, b_):
        return a + t * (b_ - a)

    def grad(hh, gx, gy, gz):
        # Downstream masks only read bits 0-3, so no explicit `& 15` needed.
        # h < 8 <=> (h & 8) == 0 ; h < 4 <=> (h & 12) == 0
        # (h == 12) | (h == 14) <=> (h & 13) == 12
        gu = jnp.where((hh & 8) == 0, gx, gy)
        gv = jnp.where((hh & 12) == 0, gy,
                       jnp.where((hh & 13) == 12, gx, gz))
        # Sign flips via XOR of the f32 sign bit (cheaper than cmp + select).
        gu = pltpu.bitcast(pltpu.bitcast(gu, jnp.uint32) ^ ((hh & 1) << 31),
                           jnp.float32)
        gv = pltpu.bitcast(pltpu.bitcast(gv, jnp.uint32) ^ ((hh & 2) << 30),
                           jnp.float32)
        return gu + gv

    def octave_body(o, acc):
        kf = kf_ref[o]
        amp = amp_ref[o]
        z = zf_ref[o, b]
        wz = wz_ref[o, b]
        zm1 = z - 1.0

        # Matches the host-side (arange + offset) * kf bit-for-bit, so floor()
        # cells agree with the gathered hashes.
        nx = (col + xoff) * kf                       # (1, W)
        ny = (row + yoff) * kf                       # (TH, 1)
        xf = nx - jnp.floor(nx)
        yf = ny - jnp.floor(ny)
        u = fade(xf)                                 # (1, W)
        v = fade(yf)                                 # (TH, 1)
        xm1 = xf - 1.0
        ym1 = yf - 1.0

        packed = h_ref[o, 0]                         # (TH, W) uint32

        # z = 0 plane
        x0 = lerp(u, grad(packed, xf, yf, z),
                     grad(packed >> 4, xm1, yf, z))
        x1 = lerp(u, grad(packed >> 8, xf, ym1, z),
                     grad(packed >> 12, xm1, ym1, z))
        y0 = lerp(v, x0, x1)
        # z = 1 plane
        x0 = lerp(u, grad(packed >> 16, xf, yf, zm1),
                     grad(packed >> 20, xm1, yf, zm1))
        x1 = lerp(u, grad(packed >> 24, xf, ym1, zm1),
                     grad(packed >> 28, xm1, ym1, zm1))
        y1 = lerp(v, x0, x1)

        r = lerp(wz, y0, y1)
        return acc + r * amp

    acc = lax.fori_loop(0, n_oct, octave_body,
                        jnp.zeros((th, w), jnp.float32))

    out_ref[...] = acc[None]

    # Per-block global min/max (scalar; XLU is otherwise idle).  If the last
    # row tile is padded (TH does not divide H), mask the padded rows.
    if full_h % th == 0:
        mn = jnp.min(acc)
        mx = jnp.max(acc)
    else:
        rows = lax.broadcasted_iota(jnp.int32, (th, w), 0)
        valid = rows < (full_h - hi * th)
        mn = jnp.min(jnp.where(valid, acc, jnp.inf))
        mx = jnp.max(jnp.where(valid, acc, -jnp.inf))
    min_ref[...] = jnp.broadcast_to(mn, min_ref.shape)
    max_ref[...] = jnp.broadcast_to(mx, max_ref.shape)


def _postprocess_kernel(ab_ref, nm_ref, out_ref):
    """Normalize-to-[min_clamp,max_clamp] + brightness/contrast folded into a
    single FMA: out = nm * a + b.  ab_ref : SMEM (2,) f32 = [a, b]."""
    out_ref[...] = nm_ref[...] * ab_ref[0] + ab_ref[1]


# ----------------------------------------------------------------------------
# Wrapper (host-side glue + pallas_call plumbing)
# ----------------------------------------------------------------------------
def perlin_power_fractal(width, height, batch_size, X=0.0, Y=0.0, Z=0.0, frame=0,
                         evolution_factor=0.1, octaves=4, persistence=0.5,
                         lacunarity=2.0, exponent=4.0, scale=100.0,
                         brightness=0.0, contrast=0.0, seed=0,
                         min_clamp=0.0, max_clamp=1.0):
    W, H, B, O = int(width), int(height), int(batch_size), int(octaves)
    assert O >= 1

    # Permutation table. PyTorch uses torch.randperm(max(W,H)**2) under
    # torch.manual_seed; generated deterministically with JAX RNG instead.
    # TODO(synk): not bit-identical to torch.randperm for a given seed.
    key = jax.random.PRNGKey(seed)
    p = jax.random.permutation(key, max(W, H) ** 2).astype(jnp.int32)
    p = jnp.concatenate([p, p])

    xs = jnp.arange(W, dtype=jnp.float32) + jnp.float32(X)
    ys = jnp.arange(H, dtype=jnp.float32) + jnp.float32(Y)
    zs = jnp.float32(evolution_factor) * (
        jnp.arange(B, dtype=jnp.float32) + jnp.float32(Z) + jnp.float32(frame))

    # TODO(synk): this permutation-gather / nibble-pack pre-pass is plain JAX
    # (data-dependent gathers); it is the dominant HBM consumer end-to-end and
    # could be computed at lattice resolution and expanded.
    packed_list, kf_list, amp_list, zf_list, wz_list = [], [], [], [], []
    for o in range(O):
        frequency = float(lacunarity) ** o
        amplitude = float(persistence) ** o
        kf = frequency / float(scale)           # single f32 factor (kernel uses the same)

        nx = xs * jnp.float32(kf)               # (W,)
        ny = ys * jnp.float32(kf)               # (H,)
        nz = (zs + jnp.float32(frame * evolution_factor)) * jnp.float32(kf)   # (B,)

        Xi = jnp.mod(jnp.floor(nx), 255.0).astype(jnp.int32)
        Yi = jnp.mod(jnp.floor(ny), 255.0).astype(jnp.int32)
        Zi = jnp.mod(jnp.floor(nz), 255.0).astype(jnp.int32)
        zf = nz - jnp.floor(nz)                 # (B,)

        A = p[Xi][None, :] + Yi[:, None]               # (H, W)
        Bh = p[Xi + 1][None, :] + Yi[:, None]          # (H, W)
        AA = p[A][None, :, :] + Zi[:, None, None]      # (B, H, W)
        AB = p[A + 1][None, :, :] + Zi[:, None, None]
        BA = p[Bh][None, :, :] + Zi[:, None, None]
        BB = p[Bh + 1][None, :, :] + Zi[:, None, None]
        corners = (p[AA], p[BA], p[AB], p[BB],
                   p[AA + 1], p[BA + 1], p[AB + 1], p[BB + 1])

        # grad() only ever uses hash & 15 -> pack the 8 corner hashes into one
        # uint32 nibble plane: 4 B/px/octave instead of 32 B/px/octave.
        packed = jnp.zeros((B, H, W), jnp.uint32)
        for k, c in enumerate(corners):
            packed = packed | ((c & 15).astype(jnp.uint32) << (4 * k))

        packed_list.append(packed)
        kf_list.append(kf)
        # noise * amplitude**exponent, then noise_map += noise_values * amplitude
        amp_list.append((amplitude ** float(exponent)) * amplitude)
        zf_list.append(zf)
        wz_list.append(zf * zf * zf * (zf * (zf * 6.0 - 15.0) + 10.0))  # fade(zf)

    h8 = jnp.stack(packed_list, axis=0)                        # (O, B, H, W) u32
    zf_arr = jnp.stack(zf_list, axis=0).astype(jnp.float32)    # (O, B)
    wz_arr = jnp.stack(wz_list, axis=0).astype(jnp.float32)    # (O, B)
    amp_arr = jnp.asarray(amp_list, dtype=jnp.float32)         # (O,)
    kf_arr = jnp.asarray(kf_list, dtype=jnp.float32)           # (O,)
    xy_arr = jnp.asarray([X, Y], dtype=jnp.float32)            # (2,)

    # Generation-aware tiling (64 MiB fallback keeps v7x safe; v5e/v6e get
    # bigger tiles from their 128 MiB VMEM).
    phys_vmem = _physical_vmem_bytes()
    vmem_limit = max(32 * 1024 * 1024,
                     min(phys_vmem * 3 // 4, 112 * 1024 * 1024))
    tile_budget = int(vmem_limit * 0.8)
    TH = _pick_tile_h(H, W, O, tile_budget, B)
    n_ht = -(-H // TH)

    # TODO(synk): if W is not a multiple of 128, pad the lane dim host-side
    # (and crop after) to avoid masked partial-lane stores.
    kernel = functools.partial(_perlin_octaves_kernel, full_h=H)
    noise_map, mins, maxs = pl.pallas_call(
        kernel,
        out_shape=(
            jax.ShapeDtypeStruct((B, H, W), jnp.float32),
            jax.ShapeDtypeStruct((B, n_ht, 8, 128), jnp.float32),
            jax.ShapeDtypeStruct((B, n_ht, 8, 128), jnp.float32),
        ),
        grid=(B, n_ht),
        in_specs=[
            pl.BlockSpec(memory_space=pltpu.MemorySpace.SMEM),                 # zf
            pl.BlockSpec(memory_space=pltpu.MemorySpace.SMEM),                 # fade(zf)
            pl.BlockSpec(memory_space=pltpu.MemorySpace.SMEM),                 # amp
            pl.BlockSpec(memory_space=pltpu.MemorySpace.SMEM),                 # kf
            pl.BlockSpec(memory_space=pltpu.MemorySpace.SMEM),                 # [X, Y]
            pl.BlockSpec((O, 1, TH, W), lambda b, hi: (0, b, hi, 0)),          # hashes
        ],
        out_specs=(
            pl.BlockSpec((1, TH, W), lambda b, hi: (b, hi, 0)),                # noise map
            pl.BlockSpec((1, 1, 8, 128), lambda b, hi: (b, hi, 0, 0)),         # block min
            pl.BlockSpec((1, 1, 8, 128), lambda b, hi: (b, hi, 0, 0)),         # block max
        ),
        compiler_params=pltpu.CompilerParams(
            dimension_semantics=("parallel", "parallel"),
            vmem_limit_bytes=vmem_limit),
    )(zf_arr, wz_arr, amp_arr, kf_arr, xy_arr, h8)

    # Finish the global min/max on the tiny per-block partials (no extra full
    # HBM sweep over the noise map).
    mn = jnp.min(mins)
    mx = jnp.max(maxs)

    # normalize(noise_map, min_clamp, max_clamp) then (x+brightness)*(1+contrast)
    # folded into a single FMA: x*a + b.  Guard /0 for a flat map (reference
    # would produce NaN/Inf there).
    denom = jnp.where(mx > mn, mx - mn, jnp.float32(1.0))
    s = (jnp.float32(max_clamp) - jnp.float32(min_clamp)) / denom
    a_coef = s * jnp.float32(1.0 + contrast)
    b_coef = (jnp.float32(min_clamp) - mn * s
              + jnp.float32(brightness)) * jnp.float32(1.0 + contrast)
    ab = jnp.stack([a_coef, b_coef]).astype(jnp.float32)

    latent = pl.pallas_call(
        _postprocess_kernel,
        out_shape=jax.ShapeDtypeStruct((B, H, W), jnp.float32),
        grid=(B, n_ht),
        in_specs=[
            pl.BlockSpec(memory_space=pltpu.MemorySpace.SMEM),
            pl.BlockSpec((1, TH, W), lambda b, hi: (b, hi, 0)),
        ],
        out_specs=pl.BlockSpec((1, TH, W), lambda b, hi: (b, hi, 0)),
        input_output_aliases={1: 0},   # reuse the noise_map HBM buffer
        compiler_params=pltpu.CompilerParams(
            dimension_semantics=("parallel", "parallel"),
            vmem_limit_bytes=vmem_limit),
    )(ab, noise_map)

    # TODO(synk): the reference's trailing `normalize(latent)` (no target min/
    # max) rescales latent onto its own [min, max] -> identity in the upstream
    # implementation; dropped here (fp-rounding-only difference).

    return latent[..., None]  # (B, H, W, 1)


if __name__ == "__main__":
    out = perlin_power_fractal(
        width=128, height=64, batch_size=2,
        X=0.0, Y=0.0, Z=0.0, frame=0,
        evolution_factor=0.1, octaves=4, persistence=0.5,
        lacunarity=2.0, exponent=4.0, scale=100.0,
        brightness=0.0, contrast=0.0, seed=0,
        min_clamp=0.0, max_clamp=1.0)
    out = jax.block_until_ready(out)
    assert out.shape == (2, 64, 128, 1), out.shape
    assert out.dtype == jnp.float32
    assert bool(jnp.isfinite(out).all())
    print("KERNEL_OK")
</pallas_src>

<mosaic_0001>
module attributes {stable_mosaic.version = 11 : i64} {
  func.func @_perlin_octaves_kernel(%arg0: i32, %arg1: i32, %arg2: memref<4x2xf32, #tpu.memory_space<smem>>, %arg3: memref<4x2xf32, #tpu.memory_space<smem>>, %arg4: memref<4xf32, #tpu.memory_space<smem>>, %arg5: memref<4xf32, #tpu.memory_space<smem>>, %arg6: memref<2xf32, #tpu.memory_space<smem>>, %arg7: memref<4x1x64x128xi32, #tpu.memory_space<vmem>>, %arg8: memref<1x64x128xf32, #tpu.memory_space<vmem>>, %arg9: memref<1x1x8x128xf32, #tpu.memory_space<vmem>>, %arg10: memref<1x1x8x128xf32, #tpu.memory_space<vmem>>) attributes {dimension_semantics = [#tpu.dimension_semantics<parallel>, #tpu.dimension_semantics<parallel>], iteration_bounds = array<i64: 2, 1>, scalar_prefetch = 0 : i64, scratch_operands = 0 : i64, tpu.core_type = #tpu.core_type<tc>, window_params = [{transform_indices = @transform_0, window_bounds = array<i64: 4, 2>}, {transform_indices = @transform_1, window_bounds = array<i64: 4, 2>}, {transform_indices = @transform_2, window_bounds = array<i64: 4>}, {transform_indices = @transform_3, window_bounds = array<i64: 4>}, {transform_indices = @transform_4, window_bounds = array<i64: 2>}, {transform_indices = @transform_5, window_bounds = array<i64: 4, 1, 64, 128>}, {transform_indices = @transform_6, window_bounds = array<i64: 1, 64, 128>}, {transform_indices = @transform_7, window_bounds = array<i64: 1, 1, 8, 128>}, {transform_indices = @transform_8, window_bounds = array<i64: 1, 1, 8, 128>}]} {
    %c0 = arith.constant 0 : index
    %0 = memref.load %arg6[%c0] : memref<2xf32, #tpu.memory_space<smem>>
    %c1 = arith.constant 1 : index
    %1 = memref.load %arg6[%c1] : memref<2xf32, #tpu.memory_space<smem>>
    %2 = tpu.iota {dimensions = array<i32: 1>} : vector<1x128xi32>
    %3 = arith.sitofp %2 : vector<1x128xi32> to vector<1x128xf32>
    %4 = tpu.iota {dimensions = array<i32: 0>} : vector<64x1xi32>
    %c64_i32 = arith.constant 64 : i32
    %5 = arith.muli %arg1, %c64_i32 : i32
    %6 = vector.broadcast %5 : i32 to vector<64x1xi32>
    %7 = arith.addi %4, %6 : vector<64x1xi32>
    %8 = arith.sitofp %7 : vector<64x1xi32> to vector<64x1xf32>
    %cst = arith.constant 0.000000e+00 : f32
    %9 = vector.broadcast %cst : f32 to vector<64x128xf32>
    %c0_i32 = arith.constant 0 : i32
    %c4_i32 = arith.constant 4 : i32
    %10 = arith.addi %c0_i32, %c4_i32 : i32
    %c1_i32 = arith.constant 1 : i32
    %11 = scf.for %arg11 = %c0_i32 to %10 step %c1_i32 iter_args(%arg12 = %9) -> (vector<64x128xf32>)  : i32 {
      %26 = arith.index_cast %arg11 : i32 to index
      %27 = memref.load %arg5[%26] : memref<4xf32, #tpu.memory_space<smem>>
      %28 = arith.index_cast %arg11 : i32 to index
      %29 = memref.load %arg4[%28] : memref<4xf32, #tpu.memory_space<smem>>
      %30 = arith.index_cast %arg11 : i32 to index
      %31 = arith.index_cast %arg0 : i32 to index
      %32 = memref.load %arg2[%30, %31] : memref<4x2xf32, #tpu.memory_space<smem>>
      %33 = arith.index_cast %arg11 : i32 to index
      %34 = arith.index_cast %arg0 : i32 to index
      %35 = memref.load %arg3[%33, %34] : memref<4x2xf32, #tpu.memory_space<smem>>
      %cst_14 = arith.constant 1.000000e+00 : f32
      %36 = arith.subf %32, %cst_14 : f32
      %37 = vector.broadcast %0 : f32 to vector<1x128xf32>
      %38 = arith.addf %3, %37 : vector<1x128xf32>
      %39 = vector.broadcast %27 : f32 to vector<1x128xf32>
      %40 = arith.mulf %38, %39 : vector<1x128xf32>
      %41 = vector.broadcast %1 : f32 to vector<64x1xf32>
      %42 = arith.addf %8, %41 : vector<64x1xf32>
      %43 = vector.broadcast %27 : f32 to vector<64x1xf32>
      %44 = arith.mulf %42, %43 : vector<64x1xf32>
      %45 = math.floor %40 : vector<1x128xf32>
      %46 = arith.subf %40, %45 : vector<1x128xf32>
      %47 = math.floor %44 : vector<64x1xf32>
      %48 = arith.subf %44, %47 : vector<64x1xf32>
      %49 = arith.mulf %46, %46 : vector<1x128xf32>
      %50 = arith.mulf %49, %46 : vector<1x128xf32>
      %cst_15 = arith.constant 6.000000e+00 : f32
      %51 = vector.broadcast %cst_15 : f32 to vector<1x128xf32>
      %52 = arith.mulf %46, %51 : vector<1x128xf32>
      %cst_16 = arith.constant 1.500000e+01 : f32
      %53 = vector.broadcast %cst_16 : f32 to vector<1x128xf32>
      %54 = arith.subf %52, %53 : vector<1x128xf32>
      %55 = arith.mulf %46, %54 : vector<1x128xf32>
      %cst_17 = arith.constant 1.000000e+01 : f32
      %56 = vector.broadcast %cst_17 : f32 to vector<1x128xf32>
      %57 = arith.addf %55, %56 : vector<1x128xf32>
      %58 = arith.mulf %50, %57 : vector<1x128xf32>
      %59 = arith.mulf %48, %48 : vector<64x1xf32>
      %60 = arith.mulf %59, %48 : vector<64x1xf32>
      %cst_18 = arith.constant 6.000000e+00 : f32
      %61 = vector.broadcast %cst_18 : f32 to vector<64x1xf32>
      %62 = arith.mulf %48, %61 : vector<64x1xf32>
      %cst_19 = arith.constant 1.500000e+01 : f32
      %63 = vector.broadcast %cst_19 : f32 to vector<64x1xf32>
      %64 = arith.subf %62, %63 : vector<64x1xf32>
      %65 = arith.mulf %48, %64 : vector<64x1xf32>
      %cst_20 = arith.constant 1.000000e+01 : f32
      %66 = vector.broadcast %cst_20 : f32 to vector<64x1xf32>
      %67 = arith.addf %65, %66 : vector<64x1xf32>
      %68 = arith.mulf %60, %67 : vector<64x1xf32>
      %cst_21 = arith.constant 1.000000e+00 : f32
      %69 = vector.broadcast %cst_21 : f32 to vector<1x128xf32>
      %70 = arith.subf %46, %69 : vector<1x128xf32>
      %cst_22 = arith.constant 1.000000e+00 : f32
      %71 = vector.broadcast %cst_22 : f32 to vector<64x1xf32>
      %72 = arith.subf %48, %71 : vector<64x1xf32>
      %73 = arith.index_cast %arg11 : i32 to index
      %c0_23 = arith.constant 0 : index
      %c0_24 = arith.constant 0 : index
      %c0_25 = arith.constant 0 : index
      %74 = vector.load %arg7[%73, %c0_23, %c0_24, %c0_25] : memref<4x1x64x128xi32, #tpu.memory_space<vmem>>, vector<1x1x64x128xi32>
      %75 = vector.shape_cast %74 : vector<1x1x64x128xi32> to vector<64x128xi32>
      %c8_i32 = arith.constant 8 : i32
      %76 = vector.broadcast %c8_i32 : i32 to vector<64x128xi32>
      %77 = arith.andi %75, %76 : vector<64x128xi32>
      %c0_i32_26 = arith.constant 0 : i32
      %78 = vector.broadcast %c0_i32_26 : i32 to vector<64x128xi32>
      %79 = arith.cmpi eq, %77, %78 : vector<64x128xi32>
      %80 = vector.shape_cast %46 : vector<1x128xf32> to vector<1x128xf32>
      %81 = vector.broadcast %80 : vector<1x128xf32> to vector<64x128xf32>
      %82 = vector.shape_cast %48 : vector<64x1xf32> to vector<64x1xf32>
      %83 = vector.broadcast %82 : vector<64x1xf32> to vector<64x128xf32>
      %84 = arith.select %79, %81, %83 : vector<64x128xi1>, vector<64x128xf32>
      %c12_i32 = arith.constant 12 : i32
      %85 = vector.broadcast %c12_i32 : i32 to vector<64x128xi32>
      %86 = arith.andi %75, %85 : vector<64x128xi32>
      %c0_i32_27 = arith.constant 0 : i32
      %87 = vector.broadcast %c0_i32_27 : i32 to vector<64x128xi32>
      %88 = arith.cmpi eq, %86, %87 : vector<64x128xi32>
      %c13_i32 = arith.constant 13 : i32
      %89 = vector.broadcast %c13_i32 : i32 to vector<64x128xi32>
      %90 = arith.andi %75, %89 : vector<64x128xi32>
      %c12_i32_28 = arith.constant 12 : i32
      %91 = vector.broadcast %c12_i32_28 : i32 to vector<64x128xi32>
      %92 = arith.cmpi eq, %90, %91 : vector<64x128xi32>
      %93 = vector.shape_cast %46 : vector<1x128xf32> to vector<1x128xf32>
      %94 = vector.broadcast %93 : vector<1x128xf32> to vector<64x128xf32>
      %95 = vector.broadcast %32 : f32 to vector<64x128xf32>
      %96 = arith.select %92, %94, %95 : vector<64x128xi1>, vector<64x128xf32>
      %97 = vector.shape_cast %48 : vector<64x1xf32> to vector<64x1xf32>
      %98 = vector.broadcast %97 : vector<64x1xf32> to vector<64x128xf32>
      %99 = arith.select %88, %98, %96 : vector<64x128xi1>, vector<64x128xf32>
      %100 = tpu.bitcast %84 : vector<64x128xf32> -> vector<64x128xi32>
      %c1_i32_29 = arith.constant 1 : i32
      %101 = vector.broadcast %c1_i32_29 : i32 to vector<64x128xi32>
      %102 = arith.andi %75, %101 : vector<64x128xi32>
      %c31_i32 = arith.constant 31 : i32
      %103 = vector.broadcast %c31_i32 : i32 to vector<64x128xi32>
      %104 = arith.shli %102, %103 : vector<64x128xi32>
      %105 = arith.xori %100, %104 : vector<64x128xi32>
      %106 = tpu.bitcast %105 : vector<64x128xi32> -> vector<64x128xf32>
      %107 = tpu.bitcast %99 : vector<64x128xf32> -> vector<64x128xi32>
      %c2_i32 = arith.constant 2 : i32
      %108 = vector.broadcast %c2_i32 : i32 to vector<64x128xi32>
      %109 = arith.andi %75, %108 : vector<64x128xi32>
      %c30_i32 = arith.constant 30 : i32
      %110 = vector.broadcast %c30_i32 : i32 to vector<64x128xi32>
      %111 = arith.shli %109, %110 : vector<64x128xi32>
      %112 = arith.xori %107, %111 : vector<64x128xi32>
      %113 = tpu.bitcast %112 : vector<64x128xi32> -> vector<64x128xf32>
      %114 = arith.addf %106, %113 : vector<64x128xf32>
      %c4_i32_30 = arith.constant 4 : i32
      %115 = vector.broadcast %c4_i32_30 : i32 to vector<64x128xi32>
      %116 = arith.shrui %75, %115 : vector<64x128xi32>
      %c8_i32_31 = arith.constant 8 : i32
      %117 = vector.broadcast %c8_i32_31 : i32 to vector<64x128xi32>
      %118 = arith.andi %116, %117 : vector<64x128xi32>
      %c0_i32_32 = arith.constant 0 : i32
      %119 = vector.broadcast %c0_i32_32 : i32 to vector<64x128xi32>
      %120 = arith.cmpi eq, %118, %119 : vector<64x128xi32>
      %121 = vector.shape_cast %70 : vector<1x128xf32> to vector<1x128xf32>
      %122 = vector.broadcast %121 : vector<1x128xf32> to vector<64x128xf32>
      %123 = vector.shape_cast %48 : vector<64x1xf32> to vector<64x1xf32>
      %124 = vector.broadcast %123 : vector<64x1xf32> to vector<64x128xf32>
      %125 = arith.select %120, %122, %124 : vector<64x128xi1>, vector<64x128xf32>
      %c12_i32_33 = arith.constant 12 : i32
      %126 = vector.broadcast %c12_i32_33 : i32 to vector<64x128xi32>
      %127 = arith.andi %116, %126 : vector<64x128xi32>
      %c0_i32_34 = arith.constant 0 : i32
      %128 = vector.broadcast %c0_i32_34 : i32 to vector<64x128xi32>
      %129 = arith.cmpi eq, %127, %128 : vector<64x128xi32>
      %c13_i32_35 = arith.constant 13 : i32
      %130 = vector.broadcast %c13_i32_35 : i32 to vector<64x128xi32>
      %131 = arith.andi %116, %130 : vector<64x128xi32>
      %c12_i32_36 = arith.constant 12 : i32
      %132 = vector.broadcast %c12_i32_36 : i32 to vector<64x128xi32>
      %133 = arith.cmpi eq, %131, %132 : vector<64x128xi32>
      %134 = vector.shape_cast %70 : vector<1x128xf32> to vector<1x128xf32>
      %135 = vector.broadcast %134 : vector<1x128xf32> to vector<64x128xf32>
      %136 = vector.broadcast %32 : f32 to vector<64x128xf32>
      %137 = arith.select %133, %135, %136 : vector<64x128xi1>, vector<64x128xf32>
      %138 = vector.shape_cast %48 : vector<64x1xf32> to vector<64x1xf32>
      %139 = vector.broadcast %138 : vector<64x1xf32> to vector<64x128xf32>
      %140 = arith.select %129, %139, %137 : vector<64x128xi1>, vector<64x128xf32>
      %141 = tpu.bitcast %125 : vector<64x128xf32> -> vector<64x128xi32>
      %c1_i32_37 = arith.constant 1 : i32
      %142 = vector.broadcast %c1_i32_37 : i32 to vector<64x128xi32>
      %143 = arith.andi %116, %142 : vector<64x128xi32>
      %c31_i32_38 = arith.constant 31 : i32
      %144 = vector.broadcast %c31_i32_38 : i32 to vector<64x128xi32>
      %145 = arith.shli %143, %144 : vector<64x128xi32>
      %146 = arith.xori %141, %145 : vector<64x128xi32>
      %147 = tpu.bitcast %146 : vector<64x128xi32> -> vector<64x128xf32>
      %148 = tpu.bitcast %140 : vector<64x128xf32> -> vector<64x128xi32>
      %c2_i32_39 = arith.constant 2 : i32
      %149 = vector.broadcast %c2_i32_39 : i32 to vector<64x128xi32>
      %150 = arith.andi %116, %149 : vector<64x128xi32>
      %c30_i32_40 = arith.constant 30 : i32
      %151 = vector.broadcast %c30_i32_40 : i32 to vector<64x128xi32>
      %152 = arith.shli %150, %151 : vector<64x128xi32>
      %153 = arith.xori %148, %152 : vector<64x128xi32>
      %154 = tpu.bitcast %153 : vector<64x128xi32> -> vector<64x128xf32>
      %155 = arith.addf %147, %154 : vector<64x128xf32>
      %156 = arith.subf %155, %114 : vector<64x128xf32>
      %157 = vector.broadcast %58 : vector<1x128xf32> to vector<64x128xf32>
      %158 = arith.mulf %157, %156 : vector<64x128xf32>
      %159 = arith.addf %114, %158 : vector<64x128xf32>
      %c8_i32_41 = arith.constant 8 : i32
      %160 = vector.broadcast %c8_i32_41 : i32 to vector<64x128xi32>
      %161 = arith.shrui %75, %160 : vector<64x128xi32>
      %c8_i32_42 = arith.constant 8 : i32
      %162 = vector.broadcast %c8_i32_42 : i32 to vector<64x128xi32>
      %163 = arith.andi %161, %162 : vector<64x128xi32>
      %c0_i32_43 = arith.constant 0 : i32
      %164 = vector.broadcast %c0_i32_43 : i32 to vector<64x128xi32>
      %165 = arith.cmpi eq, %163, %164 : vector<64x128xi32>
      %166 = vector.shape_cast %46 : vector<1x128xf32> to vector<1x128xf32>
      %167 = vector.broadcast %166 : vector<1x128xf32> to vector<64x128xf32>
      %168 = vector.shape_cast %72 : vector<64x1xf32> to vector<64x1xf32>
      %169 = vector.broadcast %168 : vector<64x1xf32> to vector<64x128xf32>
      %170 = arith.select %165, %167, %169 : vector<64x128xi1>, vector<64x128xf32>
      %c12_i32_44 = arith.constant 12 : i32
      %171 = vector.broadcast %c12_i32_44 : i32 to vector<64x128xi32>
      %172 = arith.andi %161, %171 : vector<64x128xi32>
      %c0_i32_45 = arith.constant 0 : i32
      %173 = vector.broadcast %c0_i32_45 : i32 to vector<64x128xi32>
      %174 = arith.cmpi eq, %172, %173 : vector<64x128xi32>
      %c13_i32_46 = arith.constant 13 : i32
      %175 = vector.broadcast %c13_i32_46 : i32 to vector<64x128xi32>
      %176 = arith.andi %161, %175 : vector<64x128xi32>
      %c12_i32_47 = arith.constant 12 : i32
      %177 = vector.broadcast %c12_i32_47 : i32 to vector<64x128xi32>
      %178 = arith.cmpi eq, %176, %177 : vector<64x128xi32>
      %179 = vector.shape_cast %46 : vector<1x128xf32> to vector<1x128xf32>
      %180 = vector.broadcast %179 : vector<1x128xf32> to vector<64x128xf32>
      %181 = vector.broadcast %32 : f32 to vector<64x128xf32>
      %182 = arith.select %178, %180, %181 : vector<64x128xi1>, vector<64x128xf32>
      %183 = vector.shape_cast %72 : vector<64x1xf32> to vector<64x1xf32>
      %184 = vector.broadcast %183 : vector<64x1xf32> to vector<64x128xf32>
      %185 = arith.select %174, %184, %182 : vector<64x128xi1>, vector<64x128xf32>
      %186 = tpu.bitcast %170 : vector<64x128xf32> -> vector<64x128xi32>
      %c1_i32_48 = arith.constant 1 : i32
      %187 = vector.broadcast %c1_i32_48 : i32 to vector<64x128xi32>
      %188 = arith.andi %161, %187 : vector<64x128xi32>
      %c31_i32_49 = arith.constant 31 : i32
      %189 = vector.broadcast %c31_i32_49 : i32 to vector<64x128xi32>
      %190 = arith.shli %188, %189 : vector<64x128xi32>
      %191 = arith.xori %186, %190 : vector<64x128xi32>
      %192 = tpu.bitcast %191 : vector<64x128xi32> -> vector<64x128xf32>
      %193 = tpu.bitcast %185 : vector<64x128xf32> -> vector<64x128xi32>
      %c2_i32_50 = arith.constant 2 : i32
      %194 = vector.broadcast %c2_i32_50 : i32 to vector<64x128xi32>
      %195 = arith.andi %161, %194 : vector<64x128xi32>
      %c30_i32_51 = arith.constant 30 : i32
      %196 = vector.broadcast %c30_i32_51 : i32 to vector<64x128xi32>
      %197 = arith.shli %195, %196 : vector<64x128xi32>
      %198 = arith.xori %193, %197 : vector<64x128xi32>
      %199 = tpu.bitcast %198 : vector<64x128xi32> -> vector<64x128xf32>
      %200 = arith.addf %192, %199 : vector<64x128xf32>
      %c12_i32_52 = arith.constant 12 : i32
      %201 = vector.broadcast %c12_i32_52 : i32 to vector<64x128xi32>
      %202 = arith.shrui %75, %201 : vector<64x128xi32>
      %c8_i32_53 = arith.constant 8 : i32
      %203 = vector.broadcast %c8_i32_53 : i32 to vector<64x128xi32>
      %204 = arith.andi %202, %203 : vector<64x128xi32>
      %c0_i32_54 = arith.constant 0 : i32
      %205 = vector.broadcast %c0_i32_54 : i32 to vector<64x128xi32>
      %206 = arith.cmpi eq, %204, %205 : vector<64x128xi32>
      %207 = vector.shape_cast %70 : vector<1x128xf32> to vector<1x128xf32>
      %208 = vector.broadcast %207 : vector<1x128xf32> to vector<64x128xf32>
      %209 = vector.shape_cast %72 : vector<64x1xf32> to vector<64x1xf32>
      %210 = vector.broadcast %209 : vector<64x1xf32> to vector<64x128xf32>
      %211 = arith.select %206, %208, %210 : vector<64x128xi1>, vector<64x128xf32>
      %c12_i32_55 = arith.constant 12 : i32
      %212 = vector.broadcast %c12_i32_55 : i32 to vector<64x128xi32>
      %213 = arith.andi %202, %212 : vector<64x128xi32>
      %c0_i32_56 = arith.constant 0 : i32
      %214 = vector.broadcast %c0_i32_56 : i32 to vector<64x128xi32>
      %215 = arith.cmpi eq, %213, %214 : vector<64x128xi32>
      %c13_i32_57 = arith.constant 13 : i32
      %216 = vector.broadcast %c13_i32_57 : i32 to vector<64x128xi32>
      %217 = arith.andi %202, %216 : vector<64x128xi32>
      %c12_i32_58 = arith.constant 12 : i32
      %218 = vector.broadcast %c12_i32_58 : i32 to vector<64x128xi32>
      %219 = arith.cmpi eq, %217, %218 : vector<64x128xi32>
      %220 = vector.shape_cast %70 : vector<1x128xf32> to vector<1x128xf32>
      %221 = vector.broadcast %220 : vector<1x128xf32> to vector<64x128xf32>
      %222 = vector.broadcast %32 : f32 to vector<64x128xf32>
      %223 = arith.select %219, %221, %222 : vector<64x128xi1>, vector<64x128xf32>
      %224 = vector.shape_cast %72 : vector<64x1xf32> to vector<64x1xf32>
      %225 = vector.broadcast %224 : vector<64x1xf32> to vector<64x128xf32>
      %226 = arith.select %215, %225, %223 : vector<64x128xi1>, vector<64x128xf32>
      %227 = tpu.bitcast %211 : vector<64x128xf32> -> vector<64x128xi32>
      %c1_i32_59 = arith.constant 1 : i32
      %228 = vector.broadcast %c1_i32_59 : i32 to vector<64x128xi32>
      %229 = arith.andi %202, %228 : vector<64x128xi32>
      %c31_i32_60 = arith.constant 31 : i32
      %230 = vector.broadcast %c31_i32_60 : i32 to vector<64x128xi32>
      %231 = arith.shli %229, %230 : vector<64x128xi32>
      %232 = arith.xori %227, %231 : vector<64x128xi32>
      %233 = tpu.bitcast %232 : vector<64x128xi32> -> vector<64x128xf32>
      %234 = tpu.bitcast %226 : vector<64x128xf32> -> vector<64x128xi32>
      %c2_i32_61 = arith.constant 2 : i32
      %235 = vector.broadcast %c2_i32_61 : i32 to vector<64x128xi32>
      %236 = arith.andi %202, %235 : vector<64x128xi32>
      %c30_i32_62 = arith.constant 30 : i32
      %237 = vector.broadcast %c30_i32_62 : i32 to vector<64x128xi32>
      %238 = arith.shli %236, %237 : vector<64x128xi32>
      %239 = arith.xori %234, %238 : vector<64x128xi32>
      %240 = tpu.bitcast %239 : vector<64x128xi32> -> vector<64x128xf32>
      %241 = arith.addf %233, %240 : vector<64x128xf32>
      %242 = arith.subf %241, %200 : vector<64x128xf32>
      %243 = vector.broadcast %58 : vector<1x128xf32> to vector<64x128xf32>
      %244 = arith.mulf %243, %242 : vector<64x128xf32>
      %245 = arith.addf %200, %244 : vector<64x128xf32>
      %246 = arith.subf %245, %159 : vector<64x128xf32>
      %247 = vector.broadcast %68 : vector<64x1xf32> to vector<64x128xf32>
      %248 = arith.mulf %247, %246 : vector<64x128xf32>
      %249 = arith.addf %159, %248 : vector<64x128xf32>
      %c16_i32 = arith.constant 16 : i32
      %250 = vector.broadcast %c16_i32 : i32 to vector<64x128xi32>
      %251 = arith.shrui %75, %250 : vector<64x128xi32>
      %c8_i32_63 = arith.constant 8 : i32
      %252 = vector.broadcast %c8_i32_63 : i32 to vector<64x128xi32>
      %253 = arith.andi %251, %252 : vector<64x128xi32>
      %c0_i32_64 = arith.constant 0 : i32
      %254 = vector.broadcast %c0_i32_64 : i32 to vector<64x128xi32>
      %255 = arith.cmpi eq, %253, %254 : vector<64x128xi32>
      %256 = vector.shape_cast %46 : vector<1x128xf32> to vector<1x128xf32>
      %257 = vector.broadcast %256 : vector<1x128xf32> to vector<64x128xf32>
      %258 = vector.shape_cast %48 : vector<64x1xf32> to vector<64x1xf32>
      %259 = vector.broadcast %258 : vector<64x1xf32> to vector<64x128xf32>
      %260 = arith.select %255, %257, %259 : vector<64x128xi1>, vector<64x128xf32>
      %c12_i32_65 = arith.constant 12 : i32
      %261 = vector.broadcast %c12_i32_65 : i32 to vector<64x128xi32>
      %262 = arith.andi %251, %261 : vector<64x128xi32>
      %c0_i32_66 = arith.constant 0 : i32
      %263 = vector.broadcast %c0_i32_66 : i32 to vector<64x128xi32>
      %264 = arith.cmpi eq, %262, %263 : vector<64x128xi32>
      %c13_i32_67 = arith.constant 13 : i32
      %265 = vector.broadcast %c13_i32_67 : i32 to vector<64x128xi32>
      %266 = arith.andi %251, %265 : vector<64x128xi32>
      %c12_i32_68 = arith.constant 12 : i32
      %267 = vector.broadcast %c12_i32_68 : i32 to vector<64x128xi32>
      %268 = arith.cmpi eq, %266, %267 : vector<64x128xi32>
      %269 = vector.shape_cast %46 : vector<1x128xf32> to vector<1x128xf32>
      %270 = vector.broadcast %269 : vector<1x128xf32> to vector<64x128xf32>
      %271 = vector.broadcast %36 : f32 to vector<64x128xf32>
      %272 = arith.select %268, %270, %271 : vector<64x128xi1>, vector<64x128xf32>
      %273 = vector.shape_cast %48 : vector<64x1xf32> to vector<64x1xf32>
      %274 = vector.broadcast %273 : vector<64x1xf32> to vector<64x128xf32>
      %275 = arith.select %264, %274, %272 : vector<64x128xi1>, vector<64x128xf32>
      %276 = tpu.bitcast %260 : vector<64x128xf32> -> vector<64x128xi32>
      %c1_i32_69 = arith.constant 1 : i32
      %277 = vector.broadcast %c1_i32_69 : i32 to vector<64x128xi32>
      %278 = arith.andi %251, %277 : vector<64x128xi32>
      %c31_i32_70 = arith.constant 31 : i32
      %279 = vector.broadcast %c31_i32_70 : i32 to vector<64x128xi32>
      %280 = arith.shli %278, %279 : vector<64x128xi32>
      %281 = arith.xori %276, %280 : vector<64x128xi32>
      %282 = tpu.bitcast %281 : vector<64x128xi32> -> vector<64x128xf32>
      %283 = tpu.bitcast %275 : vector<64x128xf32> -> vector<64x128xi32>
      %c2_i32_71 = arith.constant 2 : i32
      %284 = vector.broadcast %c2_i32_71 : i32 to vector<64x128xi32>
      %285 = arith.andi %251, %284 : vector<64x128xi32>
      %c30_i32_72 = arith.constant 30 : i32
      %286 = vector.broadcast %c30_i32_72 : i32 to vector<64x128xi32>
      %287 = arith.shli %285, %286 : vector<64x128xi32>
      %288 = arith.xori %283, %287 : vector<64x128xi32>
      %289 = tpu.bitcast %288 : vector<64x128xi32> -> vector<64x128xf32>
      %290 = arith.addf %282, %289 : vector<64x128xf32>
      %c20_i32 = arith.constant 20 : i32
      %291 = vector.broadcast %c20_i32 : i32 to vector<64x128xi32>
      %292 = arith.shrui %75, %291 : vector<64x128xi32>
      %c8_i32_73 = arith.constant 8 : i32
      %293 = vector.broadcast %c8_i32_73 : i32 to vector<64x128xi32>
      %294 = arith.andi %292, %293 : vector<64x128xi32>
      %c0_i32_74 = arith.constant 0 : i32
      %295 = vector.broadcast %c0_i32_74 : i32 to vector<64x128xi32>
      %296 = arith.cmpi eq, %294, %295 : vector<64x128xi32>
      %297 = vector.shape_cast %70 : vector<1x128xf32> to vector<1x128xf32>
      %298 = vector.broadcast %297 : vector<1x128xf32> to vector<64x128xf32>
      %299 = vector.shape_cast %48 : vector<64x1xf32> to vector<64x1xf32>
      %300 = vector.broadcast %299 : vector<64x1xf32> to vector<64x128xf32>
      %301 = arith.select %296, %298, %300 : vector<64x128xi1>, vector<64x128xf32>
      %c12_i32_75 = arith.constant 12 : i32
      %302 = vector.broadcast %c12_i32_75 : i32 to vector<64x128xi32>
      %303 = arith.andi %292, %302 : vector<64x128xi32>
      %c0_i32_76 = arith.constant 0 : i32
      %304 = vector.broadcast %c0_i32_76 : i32 to vector<64x128xi32>
      %305 = arith.cmpi eq, %303, %304 : vector<64x128xi32>
      %c13_i32_77 = arith.constant 13 : i32
      %306 = vector.broadcast %c13_i32_77 : i32 to vector<64x128xi32>
      %307 = arith.andi %292, %306 : vector<64x128xi32>
      %c12_i32_78 = arith.constant 12 : i32
      %308 = vector.broadcast %c12_i32_78 : i32 to vector<64x128xi32>
      %309 = arith.cmpi eq, %307, %308 : vector<64x128xi32>
      %310 = vector.shape_cast %70 : vector<1x128xf32> to vector<1x128xf32>
      %311 = vector.broadcast %310 : vector<1x128xf32> to vector<64x128xf32>
      %312 = vector.broadcast %36 : f32 to vector<64x128xf32>
      %313 = arith.select %309, %311, %312 : vector<64x128xi1>, vector<64x128xf32>
      %314 = vector.shape_cast %48 : vector<64x1xf32> to vector<64x1xf32>
      %315 = vector.broadcast %314 : vector<64x1xf32> to vector<64x128xf32>
      %316 = arith.select %305, %315, %313 : vector<64x128xi1>, vector<64x128xf32>
      %317 = tpu.bitcast %301 : vector<64x128xf32> -> vector<64x128xi32>
      %c1_i32_79 = arith.constant 1 : i32
      %318 = vector.broadcast %c1_i32_79 : i32 to vector<64x128xi32>
      %319 = arith.andi %292, %318 : vector<64x128xi32>
      %c31_i32_80 = arith.constant 31 : i32
      %320 = vector.broadcast %c31_i32_80 : i32 to vector<64x128xi32>
      %321 = arith.shli %319, %320 : vector<64x128xi32>
      %322 = arith.xori %317, %321 : vector<64x128xi32>
      %323 = tpu.bitcast %322 : vector<64x128xi32> -> vector<64x128xf32>
      %324 = tpu.bitcast %316 : vector<64x128xf32> -> vector<64x128xi32>
      %c2_i32_81 = arith.constant 2 : i32
      %325 = vector.broadcast %c2_i32_81 : i32 to vector<64x128xi32>
      %326 = arith.andi %292, %325 : vector<64x128xi32>
      %c30_i32_82 = arith.constant 30 : i32
      %327 = vector.broadcast %c30_i32_82 : i32 to vector<64x128xi32>
      %328 = arith.shli %326, %327 : vector<64x128xi32>
      %329 = arith.xori %324, %328 : vector<64x128xi32>
      %330 = tpu.bitcast %329 : vector<64x128xi32> -> vector<64x128xf32>
      %331 = arith.addf %323, %330 : vector<64x128xf32>
      %332 = arith.subf %331, %290 : vector<64x128xf32>
      %333 = vector.broadcast %58 : vector<1x128xf32> to vector<64x128xf32>
      %334 = arith.mulf %333, %332 : vector<64x128xf32>
      %335 = arith.addf %290, %334 : vector<64x128xf32>
      %c24_i32 = arith.constant 24 : i32
      %336 = vector.broadcast %c24_i32 : i32 to vector<64x128xi32>
      %337 = arith.shrui %75, %336 : vector<64x128xi32>
      %c8_i32_83 = arith.constant 8 : i32
      %338 = vector.broadcast %c8_i32_83 : i32 to vector<64x128xi32>
      %339 = arith.andi %337, %338 : vector<64x128xi32>
      %c0_i32_84 = arith.constant 0 : i32
      %340 = vector.broadcast %c0_i32_84 : i32 to vector<64x128xi32>
      %341 = arith.cmpi eq, %339, %340 : vector<64x128xi32>
      %342 = vector.shape_cast %46 : vector<1x128xf32> to vector<1x128xf32>
      %343 = vector.broadcast %342 : vector<1x128xf32> to vector<64x128xf32>
      %344 = vector.shape_cast %72 : vector<64x1xf32> to vector<64x1xf32>
      %345 = vector.broadcast %344 : vector<64x1xf32> to vector<64x128xf32>
      %346 = arith.select %341, %343, %345 : vector<64x128xi1>, vector<64x128xf32>
      %c12_i32_85 = arith.constant 12 : i32
      %347 = vector.broadcast %c12_i32_85 : i32 to vector<64x128xi32>
      %348 = arith.andi %337, %347 : vector<64x128xi32>
      %c0_i32_86 = arith.constant 0 : i32
      %349 = vector.broadcast %c0_i32_86 : i32 to vector<64x128xi32>
      %350 = arith.cmpi eq, %348, %349 : vector<64x128xi32>
      %c13_i32_87 = arith.constant 13 : i32
      %351 = vector.broadcast %c13_i32_87 : i32 to vector<64x128xi32>
      %352 = arith.andi %337, %351 : vector<64x128xi32>
      %c12_i32_88 = arith.constant 12 : i32
      %353 = vector.broadcast %c12_i32_88 : i32 to vector<64x128xi32>
      %354 = arith.cmpi eq, %352, %353 : vector<64x128xi32>
      %355 = vector.shape_cast %46 : vector<1x128xf32> to vector<1x128xf32>
      %356 = vector.broadcast %355 : vector<1x128xf32> to vector<64x128xf32>
      %357 = vector.broadcast %36 : f32 to vector<64x128xf32>
      %358 = arith.select %354, %356, %357 : vector<64x128xi1>, vector<64x128xf32>
      %359 = vector.shape_cast %72 : vector<64x1xf32> to vector<64x1xf32>
      %360 = vector.broadcast %359 : vector<64x1xf32> to vector<64x128xf32>
      %361 = arith.select %350, %360, %358 : vector<64x128xi1>, vector<64x128xf32>
      %362 = tpu.bitcast %346 : vector<64x128xf32> -> vector<64x128xi32>
      %c1_i32_89 = arith.constant 1 : i32
      %363 = vector.broadcast %c1_i32_89 : i32 to vector<64x128xi32>
      %364 = arith.andi %337, %363 : vector<64x128xi32>
      %c31_i32_90 = arith.constant 31 : i32
      %365 = vector.broadcast %c31_i32_90 : i32 to vector<64x128xi32>
      %366 = arith.shli %364, %365 : vector<64x128xi32>
      %367 = arith.xori %362, %366 : vector<64x128xi32>
      %368 = tpu.bitcast %367 : vector<64x128xi32> -> vector<64x128xf32>
      %369 = tpu.bitcast %361 : vector<64x128xf32> -> vector<64x128xi32>
      %c2_i32_91 = arith.constant 2 : i32
      %370 = vector.broadcast %c2_i32_91 : i32 to vector<64x128xi32>
      %371 = arith.andi %337, %370 : vector<64x128xi32>
      %c30_i32_92 = arith.constant 30 : i32
      %372 = vector.broadcast %c30_i32_92 : i32 to vector<64x128xi32>
      %373 = arith.shli %371, %372 : vector<64x128xi32>
      %374 = arith.xori %369, %373 : vector<64x128xi32>
      %375 = tpu.bitcast %374 : vector<64x128xi32> -> vector<64x128xf32>
      %376 = arith.addf %368, %375 : vector<64x128xf32>
      %c28_i32 = arith.constant 28 : i32
      %377 = vector.broadcast %c28_i32 : i32 to vector<64x128xi32>
      %378 = arith.shrui %75, %377 : vector<64x128xi32>
      %c8_i32_93 = arith.constant 8 : i32
      %379 = vector.broadcast %c8_i32_93 : i32 to vector<64x128xi32>
      %380 = arith.andi %378, %379 : vector<64x128xi32>
      %c0_i32_94 = arith.constant 0 : i32
      %381 = vector.broadcast %c0_i32_94 : i32 to vector<64x128xi32>
      %382 = arith.cmpi eq, %380, %381 : vector<64x128xi32>
      %383 = vector.shape_cast %70 : vector<1x128xf32> to vector<1x128xf32>
      %384 = vector.broadcast %383 : vector<1x128xf32> to vector<64x128xf32>
      %385 = vector.shape_cast %72 : vector<64x1xf32> to vector<64x1xf32>
      %386 = vector.broadcast %385 : vector<64x1xf32> to vector<64x128xf32>
      %387 = arith.select %382, %384, %386 : vector<64x128xi1>, vector<64x128xf32>
      %c12_i32_95 = arith.constant 12 : i32
      %388 = vector.broadcast %c12_i32_95 : i32 to vector<64x128xi32>
      %389 = arith.andi %378, %388 : vector<64x128xi32>
      %c0_i32_96 = arith.constant 0 : i32
      %390 = vector.broadcast %c0_i32_96 : i32 to vector<64x128xi32>
      %391 = arith.cmpi eq, %389, %390 : vector<64x128xi32>
      %c13_i32_97 = arith.constant 13 : i32
      %392 = vector.broadcast %c13_i32_97 : i32 to vector<64x128xi32>
      %393 = arith.andi %378, %392 : vector<64x128xi32>
      %c12_i32_98 = arith.constant 12 : i32
      %394 = vector.broadcast %c12_i32_98 : i32 to vector<64x128xi32>
      %395 = arith.cmpi eq, %393, %394 : vector<64x128xi32>
      %396 = vector.shape_cast %70 : vector<1x128xf32> to vector<1x128xf32>
      %397 = vector.broadcast %396 : vector<1x128xf32> to vector<64x128xf32>
      %398 = vector.broadcast %36 : f32 to vector<64x128xf32>
      %399 = arith.select %395, %397, %398 : vector<64x128xi1>, vector<64x128xf32>
      %400 = vector.shape_cast %72 : vector<64x1xf32> to vector<64x1xf32>
      %401 = vector.broadcast %400 : vector<64x1xf32> to vector<64x128xf32>
      %402 = arith.select %391, %401, %399 : vector<64x128xi1>, vector<64x128xf32>
      %403 = tpu.bitcast %387 : vector<64x128xf32> -> vector<64x128xi32>
      %c1_i32_99 = arith.constant 1 : i32
      %404 = vector.broadcast %c1_i32_99 : i32 to vector<64x128xi32>
      %405 = arith.andi %378, %404 : vector<64x128xi32>
      %c31_i32_100 = arith.constant 31 : i32
      %406 = vector.broadcast %c31_i32_100 : i32 to vector<64x128xi32>
      %407 = arith.shli %405, %406 : vector<64x128xi32>
      %408 = arith.xori %403, %407 : vector<64x128xi32>
      %409 = tpu.bitcast %408 : vector<64x128xi32> -> vector<64x128xf32>
      %410 = tpu.bitcast %402 : vector<64x128xf32> -> vector<64x128xi32>
      %c2_i32_101 = arith.constant 2 : i32
      %411 = vector.broadcast %c2_i32_101 : i32 to vector<64x128xi32>
      %412 = arith.andi %378, %411 : vector<64x128xi32>
      %c30_i32_102 = arith.constant 30 : i32
      %413 = vector.broadcast %c30_i32_102 : i32 to vector<64x128xi32>
      %414 = arith.shli %412, %413 : vector<64x128xi32>
      %415 = arith.xori %410, %414 : vector<64x128xi32>
      %416 = tpu.bitcast %415 : vector<64x128xi32> -> vector<64x128xf32>
      %417 = arith.addf %409, %416 : vector<64x128xf32>
      %418 = arith.subf %417, %376 : vector<64x128xf32>
      %419 = vector.broadcast %58 : vector<1x128xf32> to vector<64x128xf32>
      %420 = arith.mulf %419, %418 : vector<64x128xf32>
      %421 = arith.addf %376, %420 : vector<64x128xf32>
      %422 = arith.subf %421, %335 : vector<64x128xf32>
      %423 = vector.broadcast %68 : vector<64x1xf32> to vector<64x128xf32>
      %424 = arith.mulf %423, %422 : vector<64x128xf32>
      %425 = arith.addf %335, %424 : vector<64x128xf32>
      %426 = arith.subf %425, %249 : vector<64x128xf32>
      %427 = vector.broadcast %35 : f32 to vector<64x128xf32>
      %428 = arith.mulf %427, %426 : vector<64x128xf32>
      %429 = arith.addf %249, %428 : vector<64x128xf32>
      %430 = vector.broadcast %29 : f32 to vector<64x128xf32>
      %431 = arith.mulf %429, %430 : vector<64x128xf32>
      %432 = arith.addf %arg12, %431 : vector<64x128xf32>
      scf.yield %432 : vector<64x128xf32>
    }
    %c4_i32_0 = arith.constant 4 : i32
    %12 = vector.shape_cast %11 : vector<64x128xf32> to vector<1x64x128xf32>
    %c0_1 = arith.constant 0 : index
    %c0_2 = arith.constant 0 : index
    %c0_3 = arith.constant 0 : index
    %13 = vector.load %arg8[%c0_1, %c0_2, %c0_3] : memref<1x64x128xf32, #tpu.memory_space<vmem>>, vector<1x64x128xf32>
    tpu.vector_store %arg8[%c0_1, %c0_2, %c0_3], %12 {strides = array<i32>} : memref<1x64x128xf32, #tpu.memory_space<vmem>>, vector<1x64x128xf32>,
    %14 = vector.shape_cast %11 : vector<64x128xf32> to vector<1x64x128xf32>
    %cst_4 = arith.constant dense<0x7F800000> : vector<1xf32>
    %15 = vector.multi_reduction <minimumf>, %14, %cst_4 [1, 2] : vector<1x64x128xf32> to vector<1xf32>
    %16 = vector.shape_cast %15 : vector<1xf32> to vector<1x1x1xf32>
    %17 = vector.extract %16[0, 0, 0] : f32 from vector<1x1x1xf32>
    %18 = vector.shape_cast %11 : vector<64x128xf32> to vector<1x64x128xf32>
    %cst_5 = arith.constant dense<0xFF800000> : vector<1xf32>
    %19 = vector.multi_reduction <maximumf>, %18, %cst_5 [1, 2] : vector<1x64x128xf32> to vector<1xf32>
    %20 = vector.shape_cast %19 : vector<1xf32> to vector<1x1x1xf32>
    %21 = vector.extract %20[0, 0, 0] : f32 from vector<1x1x1xf32>
    %22 = vector.broadcast %17 : f32 to vector<1x1x8x128xf32>
    %c0_6 = arith.constant 0 : index
    %c0_7 = arith.constant 0 : index
    %c0_8 = arith.constant 0 : index
    %c0_9 = arith.constant 0 : index
    %23 = vector.load %arg9[%c0_6, %c0_7, %c0_8, %c0_9] : memref<1x1x8x128xf32, #tpu.memory_space<vmem>>, vector<1x1x8x128xf32>
    tpu.vector_store %arg9[%c0_6, %c0_7, %c0_8, %c0_9], %22 {strides = array<i32>} : memref<1x1x8x128xf32, #tpu.memory_space<vmem>>, vector<1x1x8x128xf32>,
    %24 = vector.broadcast %21 : f32 to vector<1x1x8x128xf32>
    %c0_10 = arith.constant 0 : index
    %c0_11 = arith.constant 0 : index
    %c0_12 = arith.constant 0 : index
    %c0_13 = arith.constant 0 : index
    %25 = vector.load %arg10[%c0_10, %c0_11, %c0_12, %c0_13] : memref<1x1x8x128xf32, #tpu.memory_space<vmem>>, vector<1x1x8x128xf32>
    tpu.vector_store %arg10[%c0_10, %c0_11, %c0_12, %c0_13], %24 {strides = array<i32>} : memref<1x1x8x128xf32, #tpu.memory_space<vmem>>, vector<1x1x8x128xf32>,
    return
  }
  func.func @transform_0(%arg0: i32, %arg1: i32) -> (i32, i32) {
    %c0_i32 = arith.constant 0 : i32
    %c0_i32_0 = arith.constant 0 : i32
    %c0_i32_1 = arith.constant 0 : i32
    return %c0_i32, %c0_i32_0 : i32, i32
  }
  func.func @transform_1(%arg0: i32, %arg1: i32) -> (i32, i32) {
    %c0_i32 = arith.constant 0 : i32
    %c0_i32_0 = arith.constant 0 : i32
    %c0_i32_1 = arith.constant 0 : i32
    return %c0_i32, %c0_i32_0 : i32, i32
  }
  func.func @transform_2(%arg0: i32, %arg1: i32) -> i32 {
    %c0_i32 = arith.constant 0 : i32
    %c0_i32_0 = arith.constant 0 : i32
    return %c0_i32 : i32
  }
  func.func @transform_3(%arg0: i32, %arg1: i32) -> i32 {
    %c0_i32 = arith.constant 0 : i32
    %c0_i32_0 = arith.constant 0 : i32
    return %c0_i32 : i32
  }
  func.func @transform_4(%arg0: i32, %arg1: i32) -> i32 {
    %c0_i32 = arith.constant 0 : i32
    %c0_i32_0 = arith.constant 0 : i32
    return %c0_i32 : i32
  }
  func.func @transform_5(%arg0: i32, %arg1: i32) -> (i32, i32, i32, i32) {
    %c0_i32 = arith.constant 0 : i32
    %c0_i32_0 = arith.constant 0 : i32
    %c0_i32_1 = arith.constant 0 : i32
    return %c0_i32, %arg0, %arg1, %c0_i32_0 : i32, i32, i32, i32
  }
  func.func @transform_6(%arg0: i32, %arg1: i32) -> (i32, i32, i32) {
    %c0_i32 = arith.constant 0 : i32
    %c0_i32_0 = arith.constant 0 : i32
    return %arg0, %arg1, %c0_i32 : i32, i32, i32
  }
  func.func @transform_7(%arg0: i32, %arg1: i32) -> (i32, i32, i32, i32) {
    %c0_i32 = arith.constant 0 : i32
    %c0_i32_0 = arith.constant 0 : i32
    %c0_i32_1 = arith.constant 0 : i32
    return %arg0, %arg1, %c0_i32, %c0_i32_0 : i32, i32, i32, i32
  }
  func.func @transform_8(%arg0: i32, %arg1: i32) -> (i32, i32, i32, i32) {
    %c0_i32 = arith.constant 0 : i32
    %c0_i32_0 = arith.constant 0 : i32
    %c0_i32_1 = arith.constant 0 : i32
    return %arg0, %arg1, %c0_i32, %c0_i32_0 : i32, i32, i32, i32
  }
}

</mosaic_0001>

<llo_original>
// kernel: tpu_custom_call.1
$region0: #{tpu_custom_call.1}
  #allocation0 [shape = 'u32[]', space=smem, size = 0x4, offset = 0x4, fixed_abs, tag = 'smem constant byte address 0x4 - core index']
  #allocation1 [shape = 'u32[144,128]{1,0:T(1,128)}', space=vmem, size = 0x12000, scoped, tag = 'internal scratch']
  #allocation17 [shape = 's32[]', space=sflag, size = 0x4, offset = 0, fixed_abs, tag = 'sflag constant byte address 0x0 - dummy sync flag']
  %s0 = inlined_call_operand.vmem [shape: f32[4,2], index: 0, kind: input, shape index: {}]
  %s1 = inlined_call_operand.vmem [shape: f32[4,2], index: 1, kind: input, shape index: {}]
  %s2 = inlined_call_operand.vmem [shape: f32[4], index: 2, kind: input, shape index: {}]
  %s3 = inlined_call_operand.vmem [shape: f32[4], index: 3, kind: input, shape index: {}]
  %s4 = inlined_call_operand.vmem [shape: f32[2], index: 4, kind: input, shape index: {}]
  %s5 = inlined_call_operand.hbm [shape: u32[4,2,64,128], index: 5, kind: input, shape index: {}]
  %s6 = inlined_call_operand.hbm [shape: f32[2,64,128], index: 6, kind: output, shape index: {0}]
  %s7 = inlined_call_operand.hbm [shape: f32[2,1,8,128], index: 7, kind: output, shape index: {1}]
  %s8 = inlined_call_operand.hbm [shape: f32[2,1,8,128], index: 8, kind: output, shape index: {2}]
  %9 = xla_tuple %s6, %s7, %s8
  %s10 = sld [smem:[#allocation0]]
  $region104: #{tpu_custom_call.1} parent=0
    _
  %s12 = ssub.s32 1, %s10
  %s13 = scalar_select 0, %s12, %s10
  $region1: #{tpu_custom_call.1} parent=0
    #allocation2 [shape = 'u8[2048]{0}', space=smem, size = 0x800, scoped, tag = 'input window, operand 0, single buffered']
    #allocation3 [shape = 's32[2]{0}', space=sflag, size = 0x8, scoped, tag = 'scoped memory for tpu_custom_call.1']
    #allocation4 [shape = 's32[2]{0}', space=sflag, size = 0x8, scoped, tag = 'scoped memory for tpu_custom_call.1']
    #allocation5 [shape = 's32[2]{0}', space=sflag, size = 0x8, scoped, tag = 'scoped memory for tpu_custom_call.1']
    #allocation6 [shape = 'u8[2048]{0}', space=smem, size = 0x800, scoped, tag = 'input window, operand 1, single buffered']
    #allocation7 [shape = 's32[1]{0}', space=sflag, size = 0x4, scoped, tag = 'scoped memory for tpu_custom_call.1']
    #allocation8 [shape = 'u8[512]{0}', space=smem, size = 0x200, scoped, tag = 'input window, operand 2, single buffered']
    #allocation9 [shape = 'u8[512]{0}', space=smem, size = 0x200, scoped, tag = 'input window, operand 3, single buffered']
    #allocation10 [shape = 's32[1]{0}', space=sflag, size = 0x4, scoped, tag = 'scoped memory for tpu_custom_call.1']
    #allocation11 [shape = 'u8[512]{0}', space=smem, size = 0x200, scoped, tag = 'input window, operand 4, single buffered']
    #allocation12 [shape = 'u8[262144]{0}', space=vmem, size = 0x40000, scoped, tag = 'input window, operand 5']
    #allocation13 [shape = 'u8[65536]{0}', space=vmem, size = 0x10000, scoped, tag = 'output window, operand 0']
    #allocation14 [shape = 'u8[8192]{0}', space=vmem, size = 0x2000, scoped, tag = 'output window, operand 1']
    #allocation15 [shape = 's32[2]{0}', space=sflag, size = 0x8, scoped, tag = 'scoped memory for tpu_custom_call.1']
    #allocation16 [shape = 'u8[8192]{0}', space=vmem, size = 0x2000, scoped, tag = 'output window, operand 2']
    %14 = vsyncpa [#allocation5], 0
    %15 = vsyncpa [#allocation7], 0
    %16 = vsyncpa [#allocation10], 0
    %17 = vsyncpa [#allocation3], 0
    %s18 = scalar_lea.sflag [#allocation3], 1
    %19 = vsyncpa %s18, 0
    %20 = vsyncpa [#allocation4], 0
    %s21 = scalar_lea.sflag [#allocation4], 1
    %22 = vsyncpa %s21, 0
    %23 = vsyncpa [#allocation15], 0
    %s24 = scalar_lea.sflag [#allocation15], 1
    %25 = vsyncpa %s24, 0
    loop: start=0, step=1, limit=4
    $region2: #{tpu_custom_call.1} parent=1 // loop_pre_header
      _
    $region3: #{tpu_custom_call.1} parent=1 // loop_header
      %s27 = sphi 0, %s31
      %p28 = scmp.ge.s32.totalorder %s27, 4
      %s34 = sphi 0, %s46
      %s35 = sphi 0, %s42
      %s36 = sphi 0, %s34
      %s37 = sphi 0, %s35
      %s38 = sphi 0, %s36
      %s39 = sphi 0, %s37
      %s47 = sphi 0, %s47
      %s49 = sphi 0, %s47
      %s50 = sphi 0, %s49
      %s64 = sphi 0, %s50
      %s68 = sphi 0, %s68
      %s70 = sphi 0, %s68
      %s71 = sphi 0, %s70
      %s85 = sphi 0, %s71
      %s89 = sphi 0, %s89
      %s91 = sphi 0, %s89
      %s92 = sphi 0, %s91
      %s106 = sphi 0, %s92
      %s110 = sphi 0, %s110
      %s112 = sphi 0, %s110
      %s113 = sphi 0, %s112
      %s127 = sphi 0, %s113
      %s131 = sphi 0, %s131
      %s133 = sphi 0, %s131
      %s134 = sphi 0, %s133
      %s148 = sphi 0, %s134
      %s156 = sphi 0, %s158
      %s159 = sphi 0, %s156
      %s160 = sphi 0, %s159
      %s176 = sphi 0, %s160
      %s184 = sphi 0, %s186
      %s187 = sphi 0, %s184
      %s188 = sphi 0, %s187
      %s204 = sphi 0, %s188
      %s212 = sphi 0, %s214
      %s215 = sphi 0, %s212
      %s216 = sphi 0, %s215
      %s232 = sphi 0, %s216
      %s240 = sphi 0, %s242
      %s243 = sphi 0, %s240
      %s244 = sphi 0, %s243
      %s260 = sphi 0, %s244
    $region4: #{tpu_custom_call.1} parent=1 // loop_header_branch
      %30 = sbr.rel (%p28) target = $region8
    $region5: #{tpu_custom_call.1} parent=1 // loop_body
      %s32 = ssub.s32 %s27, 1
      %s33 = ssub.s32 %s27, 2
      %s40 = sadd.s32 1, %s35
      %p41 = scmp.ge.s32.totalorder %s40, 1
      %s42 = scalar_select %p41, 0, %s40
      %s43 = sadd.s32 1, %s34
      %s44 = scalar_select %p41, %s43, %s34
      %p45 = scmp.ge.s32.totalorder %s44, 2
      %s46 = scalar_select %p45, 0, %s44
      %s48 = sadd.s32 %s47, 1
      %p51 = scmp.eq.s32.totalorder %s27, 1
      %p52 = scmp.ne.s32.totalorder %s47, %s49
      %p53 = scmp.eq.s32.totalorder %s27, 0
      %p54 = por %p52, %p53
      %p55 = scmp.ne.s32.totalorder %s47, %s49
      %p56 = scmp.eq.s32.totalorder %s32, 1
      %p57 = por %p55, %p56
      %p58 = scmp.ne.s32.totalorder %s49, %s50
      %p59 = scmp.eq.s32.totalorder %s32, 0
      %p60 = por %p58, %p59
      %p61 = scmp.ne.s32.totalorder %s49, %s50
      %p62 = scmp.eq.s32.totalorder %s33, 1
      %p63 = por %p61, %p62
      %p65 = scmp.ne.s32.totalorder %s50, %s64
      %p66 = scmp.eq.s32.totalorder %s33, 0
      %p67 = por %p65, %p66
      %s69 = sadd.s32 %s68, 1
      %p72 = scmp.eq.s32.totalorder %s27, 1
      %p73 = scmp.ne.s32.totalorder %s68, %s70
      %p74 = scmp.eq.s32.totalorder %s27, 0
      %p75 = por %p73, %p74
      %p76 = scmp.ne.s32.totalorder %s68, %s70
      %p77 = scmp.eq.s32.totalorder %s32, 1
      %p78 = por %p76, %p77
      %p79 = scmp.ne.s32.totalorder %s70, %s71
      %p80 = scmp.eq.s32.totalorder %s32, 0
      %p81 = por %p79, %p80
      %p82 = scmp.ne.s32.totalorder %s70, %s71
      %p83 = scmp.eq.s32.totalorder %s33, 1
      %p84 = por %p82, %p83
      %p86 = scmp.ne.s32.totalorder %s71, %s85
      %p87 = scmp.eq.s32.totalorder %s33, 0
      %p88 = por %p86, %p87
      %s90 = sadd.s32 %s89, 1
      %p93 = scmp.eq.s32.totalorder %s27, 1
      %p94 = scmp.ne.s32.totalorder %s89, %s91
      %p95 = scmp.eq.s32.totalorder %s27, 0
      %p96 = por %p94, %p95
      %p97 = scmp.ne.s32.totalorder %s89, %s91
      %p98 = scmp.eq.s32.totalorder %s32, 1
      %p99 = por %p97, %p98
      %p100 = scmp.ne.s32.totalorder %s91, %s92
      %p101 = scmp.eq.s32.totalorder %s32, 0
      %p102 = por %p100, %p101
      %p103 = scmp.ne.s32.totalorder %s91, %s92
      %p104 = scmp.eq.s32.totalorder %s33, 1
      %p105 = por %p103, %p104
      %p107 = scmp.ne.s32.totalorder %s92, %s106
      %p108 = scmp.eq.s32.totalorder %s33, 0
      %p109 = por %p107, %p108
      %s111 = sadd.s32 %s110, 1
      %p114 = scmp.eq.s32.totalorder %s27, 1
      %p115 = scmp.ne.s32.totalorder %s110, %s112
      %p116 = scmp.eq.s32.totalorder %s27, 0
      %p117 = por %p115, %p116
      %p118 = scmp.ne.s32.totalorder %s110, %s112
      %p119 = scmp.eq.s32.totalorder %s32, 1
      %p120 = por %p118, %p119
      %p121 = scmp.ne.s32.totalorder %s112, %s113
      %p122 = scmp.eq.s32.totalorder %s32, 0
      %p123 = por %p121, %p122
      %p124 = scmp.ne.s32.totalorder %s112, %s113
      %p125 = scmp.eq.s32.totalorder %s33, 1
      %p126 = por %p124, %p125
      %p128 = scmp.ne.s32.totalorder %s113, %s127
      %p129 = scmp.eq.s32.totalorder %s33, 0
      %p130 = por %p128, %p129
      %s132 = sadd.s32 %s131, 1
      %p135 = scmp.eq.s32.totalorder %s27, 1
      %p136 = scmp.ne.s32.totalorder %s131, %s133
      %p137 = scmp.eq.s32.totalorder %s27, 0
      %p138 = por %p136, %p137
      %p139 = scmp.ne.s32.totalorder %s131, %s133
      %p140 = scmp.eq.s32.totalorder %s32, 1
      %p141 = por %p139, %p140
      %p142 = scmp.ne.s32.totalorder %s133, %s134
      %p143 = scmp.eq.s32.totalorder %s32, 0
      %p144 = por %p142, %p143
      %p145 = scmp.ne.s32.totalorder %s133, %s134
      %p146 = scmp.eq.s32.totalorder %s33, 1
      %p147 = por %p145, %p146
      %p149 = scmp.ne.s32.totalorder %s134, %s148
      %p150 = scmp.eq.s32.totalorder %s33, 0
      %p151 = por %p149, %p150
      %s152 = ssub.s32 %s34, %s46
      %s153 = ssub.s32 %s35, %s42
      %s154 = sor.u32 %s152, %s153
      %p155 = scmp.eq.s32.totalorder %s154, 0
      %s157 = sadd.s32 %s156, 1
      %s158 = scalar_select %p155, %s156, %s157
      %p161 = pneg %p155
      %p162 = scmp.eq.s32.totalorder %s27, 1
      %p163 = por %p161, %p162
      %p164 = scmp.ne.s32.totalorder %s156, %s159
      %p165 = scmp.eq.s32.totalorder %s27, 0
      %p166 = por %p164, %p165
      %p167 = scmp.ne.s32.totalorder %s156, %s159
      %p168 = scmp.eq.s32.totalorder %s32, 1
      %p169 = por %p167, %p168
      %p170 = scmp.ne.s32.totalorder %s159, %s160
      %p171 = scmp.eq.s32.totalorder %s32, 0
      %p172 = por %p170, %p171
      %p173 = scmp.ne.s32.totalorder %s159, %s160
      %p174 = scmp.eq.s32.totalorder %s33, 1
      %p175 = por %p173, %p174
      %p177 = scmp.ne.s32.totalorder %s160, %s176
      %p178 = scmp.eq.s32.totalorder %s33, 0
      %p179 = por %p177, %p178
      %s180 = ssub.s32 %s34, %s46
      %s181 = ssub.s32 %s35, %s42
      %s182 = sor.u32 %s180, %s181
      %p183 = scmp.eq.s32.totalorder %s182, 0
      %s185 = sadd.s32 %s184, 1
      %s186 = scalar_select %p183, %s184, %s185
      %p189 = pneg %p183
      %p190 = scmp.eq.s32.totalorder %s27, 1
      %p191 = por %p189, %p190
      %p192 = scmp.ne.s32.totalorder %s184, %s187
      %p193 = scmp.eq.s32.totalorder %s27, 0
      %p194 = por %p192, %p193
      %p195 = scmp.ne.s32.totalorder %s184, %s187
      %p196 = scmp.eq.s32.totalorder %s32, 1
      %p197 = por %p195, %p196
      %p198 = scmp.ne.s32.totalorder %s187, %s188
      %p199 = scmp.eq.s32.totalorder %s32, 0
      %p200 = por %p198, %p199
      %p201 = scmp.ne.s32.totalorder %s187, %s188
      %p202 = scmp.eq.s32.totalorder %s33, 1
      %p203 = por %p201, %p202
      %p205 = scmp.ne.s32.totalorder %s188, %s204
      %p206 = scmp.eq.s32.totalorder %s33, 0
      %p207 = por %p205, %p206
      %s208 = ssub.s32 %s34, %s46
      %s209 = ssub.s32 %s35, %s42
      %s210 = sor.u32 %s208, %s209
      %p211 = scmp.eq.s32.totalorder %s210, 0
      %s213 = sadd.s32 %s212, 1
      %s214 = scalar_select %p211, %s212, %s213
      %p217 = pneg %p211
      %p218 = scmp.eq.s32.totalorder %s27, 1
      %p219 = por %p217, %p218
      %p220 = scmp.ne.s32.totalorder %s212, %s215
      %p221 = scmp.eq.s32.totalorder %s27, 0
      %p222 = por %p220, %p221
      %p223 = scmp.ne.s32.totalorder %s212, %s215
      %p224 = scmp.eq.s32.totalorder %s32, 1
      %p225 = por %p223, %p224
      %p226 = scmp.ne.s32.totalorder %s215, %s216
      %p227 = scmp.eq.s32.totalorder %s32, 0
      %p228 = por %p226, %p227
      %p229 = scmp.ne.s32.totalorder %s215, %s216
      %p230 = scmp.eq.s32.totalorder %s33, 1
      %p231 = por %p229, %p230
      %p233 = scmp.ne.s32.totalorder %s216, %s232
      %p234 = scmp.eq.s32.totalorder %s33, 0
      %p235 = por %p233, %p234
      %s236 = ssub.s32 %s34, %s46
      %s237 = ssub.s32 %s35, %s42
      %s238 = sor.u32 %s236, %s237
      %p239 = scmp.eq.s32.totalorder %s238, 0
      %s241 = sadd.s32 %s240, 1
      %s242 = scalar_select %p239, %s240, %s241
      %p245 = pneg %p239
      %p246 = scmp.eq.s32.totalorder %s27, 1
      %p247 = por %p245, %p246
      %p248 = scmp.ne.s32.totalorder %s240, %s243
      %p249 = scmp.eq.s32.totalorder %s27, 0
      %p250 = por %p248, %p249
      %p251 = scmp.ne.s32.totalorder %s240, %s243
      %p252 = scmp.eq.s32.totalorder %s32, 1
      %p253 = por %p251, %p252
      %p254 = scmp.ne.s32.totalorder %s243, %s244
      %p255 = scmp.eq.s32.totalorder %s32, 0
      %p256 = por %p254, %p255
      %p257 = scmp.ne.s32.totalorder %s243, %s244
      %p258 = scmp.eq.s32.totalorder %s33, 1
      %p259 = por %p257, %p258
      %p261 = scmp.ne.s32.totalorder %s244, %s260
      %p262 = scmp.eq.s32.totalorder %s33, 0
      %p263 = por %p261, %p262
      %p264 = scmp.le.s32.totalorder 1, %s27
      %p265 = scmp.lt.s32.totalorder %s27, 3
      %p266 = pnand %p264, %p265
      %p267 = pneg %p266
      // Predicated region
      $region9: #{tpu_custom_call.1} parent=5 // pred_check
        _
      $region10: #{tpu_custom_call.1} parent=5 // pred_check_branch
        %269 = sbr.rel (%p266) target = $region12
      $region11: #{tpu_custom_call.1} parent=5 // pred_region
        %s270 = ssub.s32 %s27, 1
        // Predicated region
        $region13: #{tpu_custom_call.1} parent=11 // pred_check
          %p271 = pneg %p60
        $region14: #{tpu_custom_call.1} parent=11 // pred_check_branch
          %273 = sbr.rel (%p271) target = $region16
        $region15: #{tpu_custom_call.1} parent=11 // pred_region
          %s275 = ssub.s32 64, 64
          %276 = vsyncadd [#allocation5], %s275
          %s278 = sshll.u32 %s0, 4
          %s279 = int_to_ptr.vmem [resolvable:$true] %s278
          %281 = dma.vmem_to_smem %s279, 64, [#allocation2], [#allocation5]
        $region16: #{tpu_custom_call.1} parent=11 // pred_fallthru
          _
        // Predicated region
        $region17: #{tpu_custom_call.1} parent=11 // pred_check
          %p282 = pneg %p81
        $region18: #{tpu_custom_call.1} parent=11 // pred_check_branch
          %284 = sbr.rel (%p282) target = $region20
        $region19: #{tpu_custom_call.1} parent=11 // pred_region
          %s286 = ssub.s32 64, 64
          %287 = vsyncadd [#allocation7], %s286
          %s289 = sshll.u32 %s1, 4
          %s290 = int_to_ptr.vmem [resolvable:$true] %s289
          %292 = dma.vmem_to_smem %s290, 64, [#allocation6], [#allocation7]
        $region20: #{tpu_custom_call.1} parent=11 // pred_fallthru
          _
        // Predicated region
        $region21: #{tpu_custom_call.1} parent=11 // pred_check
          %p293 = pneg %p102
        $region22: #{tpu_custom_call.1} parent=11 // pred_check_branch
          %295 = sbr.rel (%p293) target = $region24
        $region23: #{tpu_custom_call.1} parent=11 // pred_region
          %s297 = ssub.s32 16, 16
          %298 = vsyncadd [#allocation7], %s297
          %s300 = sshll.u32 %s2, 4
          %s301 = int_to_ptr.vmem [resolvable:$true] %s300
          %303 = dma.vmem_to_smem %s301, 16, [#allocation8], [#allocation7]
        $region24: #{tpu_custom_call.1} parent=11 // pred_fallthru
          _
        // Predicated region
        $region25: #{tpu_custom_call.1} parent=11 // pred_check
          %p304 = pneg %p123
        $region26: #{tpu_custom_call.1} parent=11 // pred_check_branch
          %306 = sbr.rel (%p304) target = $region28
        $region27: #{tpu_custom_call.1} parent=11 // pred_region
          %s308 = ssub.s32 16, 16
          %309 = vsyncadd [#allocation10], %s308
          %s311 = sshll.u32 %s3, 4
          %s312 = int_to_ptr.vmem [resolvable:$true] %s311
          %314 = dma.vmem_to_smem %s312, 16, [#allocation9], [#allocation10]
        $region28: #{tpu_custom_call.1} parent=11 // pred_fallthru
          _
        // Predicated region
        $region29: #{tpu_custom_call.1} parent=11 // pred_check
          %p315 = pneg %p144
        $region30: #{tpu_custom_call.1} parent=11 // pred_check_branch
          %317 = sbr.rel (%p315) target = $region32
        $region31: #{tpu_custom_call.1} parent=11 // pred_region
          %s319 = ssub.s32 16, 16
          %320 = vsyncadd [#allocation10], %s319
          %s322 = sshll.u32 %s4, 4
          %s323 = int_to_ptr.vmem [resolvable:$true] %s322
          %325 = dma.vmem_to_smem %s323, 16, [#allocation11], [#allocation10]
        $region32: #{tpu_custom_call.1} parent=11 // pred_fallthru
          _
      $region12: #{tpu_custom_call.1} parent=5 // pred_fallthru
        _
      %p326 = scmp.lt.s32.totalorder %s27, 2
      // Predicated region
      $region33: #{tpu_custom_call.1} parent=5 // pred_check
        %p327 = pneg %p326
      $region34: #{tpu_custom_call.1} parent=5 // pred_check_branch
        %329 = sbr.rel (%p327) target = $region36
      $region35: #{tpu_custom_call.1} parent=5 // pred_region
        // Predicated region
        $region37: #{tpu_custom_call.1} parent=35 // pred_check
          %p330 = pneg %p166
        $region38: #{tpu_custom_call.1} parent=35 // pred_check_branch
          %332 = sbr.rel (%p330) target = $region40
        $region39: #{tpu_custom_call.1} parent=35 // pred_region
          #allocation18 [shape = 'u32[6]{0}', space=smem, size = 0x18, scoped, tag = 'DMA stride descriptor']
          %s333 = sand.u32 %s156, 1
          %s334 = scalar_lea.sflag [#allocation3], %s333
          %s335 = sand.u32 %s156, 1
          %s336 = smul.addr %s335, 256
          %s337 = scalar_lea.vmem [#allocation12], %s336
          %s338 = smul.u32 8, %s35
          %s340 = ssub.s32 4096, 4096
          %341 = vsyncadd %s334, %s340
          %s342 = smul.addr %s34, 8
          %s343 = sadd.s32 %s338, %s342
          %s344 = smul.addr %s343, 128
          %s345 = scalar_lea.hbm %s5, %s344
          %s347 = sshll.u32 1, 14
          %s348 = sxor.u32 4294967295, %s347
          %s350 = sld [smem:[#allocation0]]
          %s351 = sadd.s32 2, %s350
          %s353 = sshll.u32 7, 26
          %s354 = sxor.u32 4294967295, %s353
          %s355 = sand.u32 0, %s354
          %s356 = sshll.u32 %s351, 26
          %s357 = sor.u32 %s355, %s356
          %s358 = sshll.u32 %s337, 4
          %s359 = int_to_ptr.vmem [resolvable:$true] %s358
          %365 = sst [smem:[#allocation18]] 2048
          %s366 = scalar_lea.smem [#allocation18], 1
          %367 = sst [smem:[%s366]] 1024
          %s368 = scalar_lea.smem [#allocation18], 2
          %369 = sst [smem:[%s368]] 8
          %s370 = scalar_lea.smem [#allocation18], 3
          %371 = sst [smem:[%s370]] 128
          %s372 = scalar_lea.smem [#allocation18], 4
          %373 = sst [smem:[%s372]] 128
          %s374 = scalar_lea.smem [#allocation18], 5
          %375 = sst [smem:[%s374]] 8
          %377 = dma.general %s345, 4096, %s359, %s334, [#allocation17], [#allocation18], %s357, 0
        $region40: #{tpu_custom_call.1} parent=35 // pred_fallthru
          _
      $region36: #{tpu_custom_call.1} parent=5 // pred_fallthru
        _
      %p378 = scmp.le.s32.totalorder 1, %s27
      %p379 = scmp.lt.s32.totalorder %s27, 3
      %p380 = pnand %p378, %p379
      %p381 = pneg %p380
      // Predicated region
      $region41: #{tpu_custom_call.1} parent=5 // pred_check
        _
      $region42: #{tpu_custom_call.1} parent=5 // pred_check_branch
        %383 = sbr.rel (%p380) target = $region44
      $region43: #{tpu_custom_call.1} parent=5 // pred_region
        %s384 = ssub.s32 %s27, 1
        // Predicated region
        $region45: #{tpu_custom_call.1} parent=43 // pred_check
          %p385 = pneg %p60
        $region46: #{tpu_custom_call.1} parent=43 // pred_check_branch
          %387 = sbr.rel (%p385) target = $region48
        $region47: #{tpu_custom_call.1} parent=43 // pred_region
          %388 = dma.done [#allocation5], 64
        $region48: #{tpu_custom_call.1} parent=43 // pred_fallthru
          _
        // Predicated region
        $region49: #{tpu_custom_call.1} parent=43 // pred_check
          %p389 = pneg %p81
        $region50: #{tpu_custom_call.1} parent=43 // pred_check_branch
          %391 = sbr.rel (%p389) target = $region52
        $region51: #{tpu_custom_call.1} parent=43 // pred_region
          %392 = dma.done [#allocation7], 64
        $region52: #{tpu_custom_call.1} parent=43 // pred_fallthru
          _
        // Predicated region
        $region53: #{tpu_custom_call.1} parent=43 // pred_check
          %p393 = pneg %p102
        $region54: #{tpu_custom_call.1} parent=43 // pred_check_branch
          %395 = sbr.rel (%p393) target = $region56
        $region55: #{tpu_custom_call.1} parent=43 // pred_region
          %396 = dma.done [#allocation7], 16
        $region56: #{tpu_custom_call.1} parent=43 // pred_fallthru
          _
        // Predicated region
        $region57: #{tpu_custom_call.1} parent=43 // pred_check
          %p397 = pneg %p123
        $region58: #{tpu_custom_call.1} parent=43 // pred_check_branch
          %399 = sbr.rel (%p397) target = $region60
        $region59: #{tpu_custom_call.1} parent=43 // pred_region
          %400 = dma.done [#allocation10], 16
        $region60: #{tpu_custom_call.1} parent=43 // pred_fallthru
          _
        // Predicated region
        $region61: #{tpu_custom_call.1} parent=43 // pred_check
          %p401 = pneg %p144
        $region62: #{tpu_custom_call.1} parent=43 // pred_check_branch
          %403 = sbr.rel (%p401) target = $region64
        $region63: #{tpu_custom_call.1} parent=43 // pred_region
          %404 = dma.done [#allocation10], 16
        $region64: #{tpu_custom_call.1} parent=43 // pred_fallthru
          _
        %s405 = sand.u32 %s159, 1
        %s406 = scalar_lea.sflag [#allocation3], %s405
        %s407 = sand.u32 %s159, 1
        %s408 = smul.addr %s407, 256
        %s409 = scalar_lea.vmem [#allocation12], %s408
        // Predicated region
        $region65: #{tpu_custom_call.1} parent=43 // pred_check
          %p410 = pneg %p172
        $region66: #{tpu_custom_call.1} parent=43 // pred_check_branch
          %412 = sbr.rel (%p410) target = $region68
        $region67: #{tpu_custom_call.1} parent=43 // pred_region
          %413 = dma.done %s406, 4096
        $region68: #{tpu_custom_call.1} parent=43 // pred_fallthru
          _
        %414 = sfence
        %p415 = pneg %p60
        %p416 = pneg %p57
        %p417 = pneg %p81
        %p418 = pneg %p78
        %p419 = pneg %p102
        %p420 = pneg %p99
        %p421 = pneg %p123
        %p422 = pneg %p120
        %p423 = pneg %p144
        %p424 = pneg %p141
        %s425 = sand.u32 %s159, 1
        %s426 = scalar_lea.sflag [#allocation3], %s425
        %s427 = sand.u32 %s159, 1
        %s428 = smul.addr %s427, 256
        %s429 = scalar_lea.vmem [#allocation12], %s428
        %p430 = pneg %p172
        %p431 = pneg %p169
        %p432 = pneg %p200
        %p433 = pneg %p197
        %s434 = sand.u32 %s187, 1
        %s435 = scalar_lea.sflag [#allocation4], %s434
        %s436 = sand.u32 %s187, 1
        %s437 = smul.addr %s436, 64
        %s438 = scalar_lea.vmem [#allocation13], %s437
        %p439 = pneg %p228
        %p440 = pneg %p225
        %s441 = sand.u32 %s32, 1
        %s442 = scalar_lea.sflag [#allocation15], %s441
        %s443 = sand.u32 %s215, 1
        %s444 = smul.addr %s443, 8
        %s445 = scalar_lea.vmem [#allocation14], %s444
        %p446 = pneg %p256
        %p447 = pneg %p253
        %s448 = sand.u32 %s32, 1
        %s449 = scalar_lea.sflag [#allocation15], %s448
        %s450 = sand.u32 %s243, 1
        %s451 = smul.addr %s450, 8
        %s452 = scalar_lea.vmem [#allocation16], %s451
        %s453 = smul.u32 8, %s37
        %s454 = smul.u32 8, %s37
        %s455 = sld [smem:[#allocation11]]
        %s456 = sld [smem:[#allocation11 + $0x1]]
        %v457 = vlaneseq
        %v458 = vand.u32 %v457, 127
        %v459 = vcvt.s32.f32 %v458
        %v460 = vlaneseq
        %v461 = vshrl.u32 %v460, 7
        %v462 = vadd.s32 %v461, 8
        %v463 = vadd.s32 %v461, 16
        %v464 = vadd.s32 %v461, 24
        %v465 = vadd.s32 %v461, 32
        %v466 = vadd.s32 %v461, 40
        %v467 = vadd.s32 %v461, 48
        %v468 = vadd.s32 %v461, 56
        %s469 = smul.u32 %s37, 64
        %v470 = vstv %s469
        %v471 = vadd.s32 %v461, %v470
        %v472 = vadd.s32 %v462, %v470
        %v473 = vadd.s32 %v463, %v470
        %v474 = vadd.s32 %v464, %v470
        %v475 = vadd.s32 %v465, %v470
        %v476 = vadd.s32 %v466, %v470
        %v477 = vadd.s32 %v467, %v470
        %v478 = vadd.s32 %v468, %v470
        %v479 = vcvt.s32.f32 %v471
        %v480 = vcvt.s32.f32 %v472
        %v481 = vcvt.s32.f32 %v473
        %v482 = vcvt.s32.f32 %v474
        %v483 = vcvt.s32.f32 %v475
        %v484 = vcvt.s32.f32 %v476
        %v485 = vcvt.s32.f32 %v477
        %v486 = vcvt.s32.f32 %v478
        loop: start=0, step=1, limit=4
        $region69: #{tpu_custom_call.1} parent=43 // loop_pre_header
          _
        $region70: #{tpu_custom_call.1} parent=43 // loop_header
          %s488 = sphi 0, %s492
          %p489 = scmp.ge.s32.totalorder %s488, 4
          %v493 = vphi 0.0, %v2150
          %v494 = vphi 0.0, %v2151
          %v495 = vphi 0.0, %v2152
          %v496 = vphi 0.0, %v2153
          %v497 = vphi 0.0, %v2154
          %v498 = vphi 0.0, %v2155
          %v499 = vphi 0.0, %v2156
          %v500 = vphi 0.0, %v2157
        $region71: #{tpu_custom_call.1} parent=43 // loop_header_branch
          %491 = sbr.rel (%p489) target = $region75
        $region72: #{tpu_custom_call.1} parent=43 // loop_body
          %s501 = sld [smem:[#allocation9 + %s488]]
          %s502 = sld [smem:[#allocation8 + %s488]]
          %s503 = sshra.s32 %s36, 7
          %s504 = sand.u32 %s36, 127
          %s505 = sadd.s32 %s503, %s488
          %s506 = smul.u32 %s505, 128
          %s507 = sshra.s32 %s36, 7
          %s508 = sand.u32 %s36, 127
          %s509 = sadd.s32 %s506, %s508
          %s510 = sld [smem:[#allocation2 + %s509]]
          %s511 = sld [smem:[#allocation6 + %s509]]
          %s512 = ssub.f32 %s510, 1.0
          %v513 = vstv %s455
          %v514 = vadd.f32 %v459, %v513
          %v515 = vstv %s501
          %v516 = vmul.f32 %v514, %v515
          %v517 = vstv %s456
          %v518 = vadd.f32 %v479, %v517
          %v519 = vadd.f32 %v480, %v517
          %v520 = vadd.f32 %v481, %v517
          %v521 = vadd.f32 %v482, %v517
          %v522 = vadd.f32 %v483, %v517
          %v523 = vadd.f32 %v484, %v517
          %v524 = vadd.f32 %v485, %v517
          %v525 = vadd.f32 %v486, %v517
          %v526 = vmul.f32 %v518, %v515
          %v527 = vmul.f32 %v519, %v515
          %v528 = vmul.f32 %v520, %v515
          %v529 = vmul.f32 %v521, %v515
          %v530 = vmul.f32 %v522, %v515
          %v531 = vmul.f32 %v523, %v515
          %v532 = vmul.f32 %v524, %v515
          %v533 = vmul.f32 %v525, %v515
          %v534 = vfloor.f32 %v516
          %v535 = vsub.f32 %v516, %v534
          %v536 = vfloor.f32 %v526
          %v537 = vfloor.f32 %v527
          %v538 = vfloor.f32 %v528
          %v539 = vfloor.f32 %v529
          %v540 = vfloor.f32 %v530
          %v541 = vfloor.f32 %v531
          %v542 = vfloor.f32 %v532
          %v543 = vfloor.f32 %v533
          %v544 = vsub.f32 %v526, %v536
          %v545 = vsub.f32 %v527, %v537
          %v546 = vsub.f32 %v528, %v538
          %v547 = vsub.f32 %v529, %v539
          %v548 = vsub.f32 %v530, %v540
          %v549 = vsub.f32 %v531, %v541
          %v550 = vsub.f32 %v532, %v542
          %v551 = vsub.f32 %v533, %v543
          %v552 = vmul.f32 %v535, %v535
          %v553 = vmul.f32 %v552, %v535
          %v554 = vmul.f32 %v535, 6.0
          %v555 = vsub.f32 %v554, 15.0
          %v556 = vmul.f32 %v535, %v555
          %v557 = vadd.f32 %v556, 10.0
          %v558 = vmul.f32 %v553, %v557
          %v559 = vmul.f32 %v544, %v544
          %v560 = vmul.f32 %v545, %v545
          %v561 = vmul.f32 %v546, %v546
          %v562 = vmul.f32 %v547, %v547
          %v563 = vmul.f32 %v548, %v548
          %v564 = vmul.f32 %v549, %v549
          %v565 = vmul.f32 %v550, %v550
          %v566 = vmul.f32 %v551, %v551
          %v567 = vmul.f32 %v559, %v544
          %v568 = vmul.f32 %v560, %v545
          %v569 = vmul.f32 %v561, %v546
          %v570 = vmul.f32 %v562, %v547
          %v571 = vmul.f32 %v563, %v548
          %v572 = vmul.f32 %v564, %v549
          %v573 = vmul.f32 %v565, %v550
          %v574 = vmul.f32 %v566, %v551
          %v575 = vmul.f32 %v544, 6.0
          %v576 = vmul.f32 %v545, 6.0
          %v577 = vmul.f32 %v546, 6.0
          %v578 = vmul.f32 %v547, 6.0
          %v579 = vmul.f32 %v548, 6.0
          %v580 = vmul.f32 %v549, 6.0
          %v581 = vmul.f32 %v550, 6.0
          %v582 = vmul.f32 %v551, 6.0
          %v583 = vsub.f32 %v575, 15.0
          %v584 = vsub.f32 %v576, 15.0
          %v585 = vsub.f32 %v577, 15.0
          %v586 = vsub.f32 %v578, 15.0
          %v587 = vsub.f32 %v579, 15.0
          %v588 = vsub.f32 %v580, 15.0
          %v589 = vsub.f32 %v581, 15.0
          %v590 = vsub.f32 %v582, 15.0
          %v591 = vmul.f32 %v544, %v583
          %v592 = vmul.f32 %v545, %v584
          %v593 = vmul.f32 %v546, %v585
          %v594 = vmul.f32 %v547, %v586
          %v595 = vmul.f32 %v548, %v587
          %v596 = vmul.f32 %v549, %v588
          %v597 = vmul.f32 %v550, %v589
          %v598 = vmul.f32 %v551, %v590
          %v599 = vadd.f32 %v591, 10.0
          %v600 = vadd.f32 %v592, 10.0
          %v601 = vadd.f32 %v593, 10.0
          %v602 = vadd.f32 %v594, 10.0
          %v603 = vadd.f32 %v595, 10.0
          %v604 = vadd.f32 %v596, 10.0
          %v605 = vadd.f32 %v597, 10.0
          %v606 = vadd.f32 %v598, 10.0
          %v607 = vmul.f32 %v567, %v599
          %v608 = vmul.f32 %v568, %v600
          %v609 = vmul.f32 %v569, %v601
          %v610 = vmul.f32 %v570, %v602
          %v611 = vmul.f32 %v571, %v603
          %v612 = vmul.f32 %v572, %v604
          %v613 = vmul.f32 %v573, %v605
          %v614 = vmul.f32 %v574, %v606
          %v615 = vsub.f32 %v535, 1.0
          %v616 = vsub.f32 %v544, 1.0
          %v617 = vsub.f32 %v545, 1.0
          %v618 = vsub.f32 %v546, 1.0
          %v619 = vsub.f32 %v547, 1.0
          %v620 = vsub.f32 %v548, 1.0
          %v621 = vsub.f32 %v549, 1.0
          %v622 = vsub.f32 %v550, 1.0
          %v623 = vsub.f32 %v551, 1.0
          %s624 = smul.u32 %s488, 64
          %s625 = scalar_lea.vmem %s409, %s624 [#allocation12]
          %v626 = vld [vmem:[%s625] sm:$0xff]
          %v627 = vld [vmem:[%s625 + $0x8] sm:$0xff]
          %v628 = vld [vmem:[%s625 + $0x10] sm:$0xff]
          %v629 = vld [vmem:[%s625 + $0x18] sm:$0xff]
          %v630 = vld [vmem:[%s625 + $0x20] sm:$0xff]
          %v631 = vld [vmem:[%s625 + $0x28] sm:$0xff]
          %v632 = vld [vmem:[%s625 + $0x30] sm:$0xff]
          %v633 = vld [vmem:[%s625 + $0x38] sm:$0xff]
          %v634 = vand.u32 %v626, 8
          %v635 = vand.u32 %v627, 8
          %v636 = vand.u32 %v628, 8
          %v637 = vand.u32 %v629, 8
          %v638 = vand.u32 %v630, 8
          %v639 = vand.u32 %v631, 8
          %v640 = vand.u32 %v632, 8
          %v641 = vand.u32 %v633, 8
          %vm642 = vcmp.eq.s32.totalorder %v634, 0
          %vm643 = vcmp.eq.s32.totalorder %v635, 0
          %vm644 = vcmp.eq.s32.totalorder %v636, 0
          %vm645 = vcmp.eq.s32.totalorder %v637, 0
          %vm646 = vcmp.eq.s32.totalorder %v638, 0
          %vm647 = vcmp.eq.s32.totalorder %v639, 0
          %vm648 = vcmp.eq.s32.totalorder %v640, 0
          %vm649 = vcmp.eq.s32.totalorder %v641, 0
          %v650 = vsel %vm642, %v535, %v544
          %v651 = vsel %vm643, %v535, %v545
          %v652 = vsel %vm644, %v535, %v546
          %v653 = vsel %vm645, %v535, %v547
          %v654 = vsel %vm646, %v535, %v548
          %v655 = vsel %vm647, %v535, %v549
          %v656 = vsel %vm648, %v535, %v550
          %v657 = vsel %vm649, %v535, %v551
          %v658 = vand.u32 %v626, 12
          %v659 = vand.u32 %v627, 12
          %v660 = vand.u32 %v628, 12
          %v661 = vand.u32 %v629, 12
          %v662 = vand.u32 %v630, 12
          %v663 = vand.u32 %v631, 12
          %v664 = vand.u32 %v632, 12
          %v665 = vand.u32 %v633, 12
          %vm666 = vcmp.eq.s32.totalorder %v658, 0
          %vm667 = vcmp.eq.s32.totalorder %v659, 0
          %vm668 = vcmp.eq.s32.totalorder %v660, 0
          %vm669 = vcmp.eq.s32.totalorder %v661, 0
          %vm670 = vcmp.eq.s32.totalorder %v662, 0
          %vm671 = vcmp.eq.s32.totalorder %v663, 0
          %vm672 = vcmp.eq.s32.totalorder %v664, 0
          %vm673 = vcmp.eq.s32.totalorder %v665, 0
          %v674 = vand.u32 %v626, 13
          %v675 = vand.u32 %v627, 13
          %v676 = vand.u32 %v628, 13
          %v677 = vand.u32 %v629, 13
          %v678 = vand.u32 %v630, 13
          %v679 = vand.u32 %v631, 13
          %v680 = vand.u32 %v632, 13
          %v681 = vand.u32 %v633, 13
          %vm682 = vcmp.eq.s32.totalorder %v674, 12
          %vm683 = vcmp.eq.s32.totalorder %v675, 12
          %vm684 = vcmp.eq.s32.totalorder %v676, 12
          %vm685 = vcmp.eq.s32.totalorder %v677, 12
          %vm686 = vcmp.eq.s32.totalorder %v678, 12
          %vm687 = vcmp.eq.s32.totalorder %v679, 12
          %vm688 = vcmp.eq.s32.totalorder %v680, 12
          %vm689 = vcmp.eq.s32.totalorder %v681, 12
          %v690 = vstv %s510
          %v691 = vsel %vm682, %v535, %v690
          %v692 = vsel %vm683, %v535, %v690
          %v693 = vsel %vm684, %v535, %v690
          %v694 = vsel %vm685, %v535, %v690
          %v695 = vsel %vm686, %v535, %v690
          %v696 = vsel %vm687, %v535, %v690
          %v697 = vsel %vm688, %v535, %v690
          %v698 = vsel %vm689, %v535, %v690
          %v699 = vsel %vm666, %v544, %v691
          %v700 = vsel %vm667, %v545, %v692
          %v701 = vsel %vm668, %v546, %v693
          %v702 = vsel %vm669, %v547, %v694
          %v703 = vsel %vm670, %v548, %v695
          %v704 = vsel %vm671, %v549, %v696
          %v705 = vsel %vm672, %v550, %v697
          %v706 = vsel %vm673, %v551, %v698
          %v715 = vand.u32 %v626, 1
          %v716 = vand.u32 %v627, 1
          %v717 = vand.u32 %v628, 1
          %v718 = vand.u32 %v629, 1
          %v719 = vand.u32 %v630, 1
          %v720 = vand.u32 %v631, 1
          %v721 = vand.u32 %v632, 1
          %v722 = vand.u32 %v633, 1
          %v723 = vshll.u32 %v715, 31
          %v724 = vshll.u32 %v716, 31
          %v725 = vshll.u32 %v717, 31
          %v726 = vshll.u32 %v718, 31
          %v727 = vshll.u32 %v719, 31
          %v728 = vshll.u32 %v720, 31
          %v729 = vshll.u32 %v721, 31
          %v730 = vshll.u32 %v722, 31
          %v731 = vxor.u32 %v650, %v723
          %v732 = vxor.u32 %v651, %v724
          %v733 = vxor.u32 %v652, %v725
          %v734 = vxor.u32 %v653, %v726
          %v735 = vxor.u32 %v654, %v727
          %v736 = vxor.u32 %v655, %v728
          %v737 = vxor.u32 %v656, %v729
          %v738 = vxor.u32 %v657, %v730
          %v755 = vand.u32 %v626, 2
          %v756 = vand.u32 %v627, 2
          %v757 = vand.u32 %v628, 2
          %v758 = vand.u32 %v629, 2
          %v759 = vand.u32 %v630, 2
          %v760 = vand.u32 %v631, 2
          %v761 = vand.u32 %v632, 2
          %v762 = vand.u32 %v633, 2
          %v763 = vshll.u32 %v755, 30
          %v764 = vshll.u32 %v756, 30
          %v765 = vshll.u32 %v757, 30
          %v766 = vshll.u32 %v758, 30
          %v767 = vshll.u32 %v759, 30
          %v768 = vshll.u32 %v760, 30
          %v769 = vshll.u32 %v761, 30
          %v770 = vshll.u32 %v762, 30
          %v771 = vxor.u32 %v699, %v763
          %v772 = vxor.u32 %v700, %v764
          %v773 = vxor.u32 %v701, %v765
          %v774 = vxor.u32 %v702, %v766
          %v775 = vxor.u32 %v703, %v767
          %v776 = vxor.u32 %v704, %v768
          %v777 = vxor.u32 %v705, %v769
          %v778 = vxor.u32 %v706, %v770
          %v787 = vadd.f32 %v731, %v771
          %v788 = vadd.f32 %v732, %v772
          %v789 = vadd.f32 %v733, %v773
          %v790 = vadd.f32 %v734, %v774
          %v791 = vadd.f32 %v735, %v775
          %v792 = vadd.f32 %v736, %v776
          %v793 = vadd.f32 %v737, %v777
          %v794 = vadd.f32 %v738, %v778
          %v795 = vshrl.u32 %v626, 4
          %v796 = vshrl.u32 %v627, 4
          %v797 = vshrl.u32 %v628, 4
          %v798 = vshrl.u32 %v629, 4
          %v799 = vshrl.u32 %v630, 4
          %v800 = vshrl.u32 %v631, 4
          %v801 = vshrl.u32 %v632, 4
          %v802 = vshrl.u32 %v633, 4
          %v803 = vand.u32 %v795, 8
          %v804 = vand.u32 %v796, 8
          %v805 = vand.u32 %v797, 8
          %v806 = vand.u32 %v798, 8
          %v807 = vand.u32 %v799, 8
          %v808 = vand.u32 %v800, 8
          %v809 = vand.u32 %v801, 8
          %v810 = vand.u32 %v802, 8
          %vm811 = vcmp.eq.s32.totalorder %v803, 0
          %vm812 = vcmp.eq.s32.totalorder %v804, 0
          %vm813 = vcmp.eq.s32.totalorder %v805, 0
          %vm814 = vcmp.eq.s32.totalorder %v806, 0
          %vm815 = vcmp.eq.s32.totalorder %v807, 0
          %vm816 = vcmp.eq.s32.totalorder %v808, 0
          %vm817 = vcmp.eq.s32.totalorder %v809, 0
          %vm818 = vcmp.eq.s32.totalorder %v810, 0
          %v819 = vsel %vm811, %v615, %v544
          %v820 = vsel %vm812, %v615, %v545
          %v821 = vsel %vm813, %v615, %v546
          %v822 = vsel %vm814, %v615, %v547
          %v823 = vsel %vm815, %v615, %v548
          %v824 = vsel %vm816, %v615, %v549
          %v825 = vsel %vm817, %v615, %v550
          %v826 = vsel %vm818, %v615, %v551
          %v827 = vand.u32 %v795, 12
          %v828 = vand.u32 %v796, 12
          %v829 = vand.u32 %v797, 12
          %v830 = vand.u32 %v798, 12
          %v831 = vand.u32 %v799, 12
          %v832 = vand.u32 %v800, 12
          %v833 = vand.u32 %v801, 12
          %v834 = vand.u32 %v802, 12
          %vm835 = vcmp.eq.s32.totalorder %v827, 0
          %vm836 = vcmp.eq.s32.totalorder %v828, 0
          %vm837 = vcmp.eq.s32.totalorder %v829, 0
          %vm838 = vcmp.eq.s32.totalorder %v830, 0
          %vm839 = vcmp.eq.s32.totalorder %v831, 0
          %vm840 = vcmp.eq.s32.totalorder %v832, 0
          %vm841 = vcmp.eq.s32.totalorder %v833, 0
          %vm842 = vcmp.eq.s32.totalorder %v834, 0
          %v843 = vand.u32 %v795, 13
          %v844 = vand.u32 %v796, 13
          %v845 = vand.u32 %v797, 13
          %v846 = vand.u32 %v798, 13
          %v847 = vand.u32 %v799, 13
          %v848 = vand.u32 %v800, 13
          %v849 = vand.u32 %v801, 13
          %v850 = vand.u32 %v802, 13
          %vm851 = vcmp.eq.s32.totalorder %v843, 12
          %vm852 = vcmp.eq.s32.totalorder %v844, 12
          %vm853 = vcmp.eq.s32.totalorder %v845, 12
          %vm854 = vcmp.eq.s32.totalorder %v846, 12
          %vm855 = vcmp.eq.s32.totalorder %v847, 12
          %vm856 = vcmp.eq.s32.totalorder %v848, 12
          %vm857 = vcmp.eq.s32.totalorder %v849, 12
          %vm858 = vcmp.eq.s32.totalorder %v850, 12
          %v859 = vsel %vm851, %v615, %v690
          %v860 = vsel %vm852, %v615, %v690
          %v861 = vsel %vm853, %v615, %v690
          %v862 = vsel %vm854, %v615, %v690
          %v863 = vsel %vm855, %v615, %v690
          %v864 = vsel %vm856, %v615, %v690
          %v865 = vsel %vm857, %v615, %v690
          %v866 = vsel %vm858, %v615, %v690
          %v867 = vsel %vm835, %v544, %v859
          %v868 = vsel %vm836, %v545, %v860
          %v869 = vsel %vm837, %v546, %v861
          %v870 = vsel %vm838, %v547, %v862
          %v871 = vsel %vm839, %v548, %v863
          %v872 = vsel %vm840, %v549, %v864
          %v873 = vsel %vm841, %v550, %v865
          %v874 = vsel %vm842, %v551, %v866
          %v883 = vand.u32 %v795, 1
          %v884 = vand.u32 %v796, 1
          %v885 = vand.u32 %v797, 1
          %v886 = vand.u32 %v798, 1
          %v887 = vand.u32 %v799, 1
          %v888 = vand.u32 %v800, 1
          %v889 = vand.u32 %v801, 1
          %v890 = vand.u32 %v802, 1
          %v891 = vshll.u32 %v883, 31
          %v892 = vshll.u32 %v884, 31
          %v893 = vshll.u32 %v885, 31
          %v894 = vshll.u32 %v886, 31
          %v895 = vshll.u32 %v887, 31
          %v896 = vshll.u32 %v888, 31
          %v897 = vshll.u32 %v889, 31
          %v898 = vshll.u32 %v890, 31
          %v899 = vxor.u32 %v819, %v891
          %v900 = vxor.u32 %v820, %v892
          %v901 = vxor.u32 %v821, %v893
          %v902 = vxor.u32 %v822, %v894
          %v903 = vxor.u32 %v823, %v895
          %v904 = vxor.u32 %v824, %v896
          %v905 = vxor.u32 %v825, %v897
          %v906 = vxor.u32 %v826, %v898
          %v923 = vand.u32 %v795, 2
          %v924 = vand.u32 %v796, 2
          %v925 = vand.u32 %v797, 2
          %v926 = vand.u32 %v798, 2
          %v927 = vand.u32 %v799, 2
          %v928 = vand.u32 %v800, 2
          %v929 = vand.u32 %v801, 2
          %v930 = vand.u32 %v802, 2
          %v931 = vshll.u32 %v923, 30
          %v932 = vshll.u32 %v924, 30
          %v933 = vshll.u32 %v925, 30
          %v934 = vshll.u32 %v926, 30
          %v935 = vshll.u32 %v927, 30
          %v936 = vshll.u32 %v928, 30
          %v937 = vshll.u32 %v929, 30
          %v938 = vshll.u32 %v930, 30
          %v939 = vxor.u32 %v867, %v931
          %v940 = vxor.u32 %v868, %v932
          %v941 = vxor.u32 %v869, %v933
          %v942 = vxor.u32 %v870, %v934
          %v943 = vxor.u32 %v871, %v935
          %v944 = vxor.u32 %v872, %v936
          %v945 = vxor.u32 %v873, %v937
          %v946 = vxor.u32 %v874, %v938
          %v955 = vadd.f32 %v899, %v939
          %v956 = vadd.f32 %v900, %v940
          %v957 = vadd.f32 %v901, %v941
          %v958 = vadd.f32 %v902, %v942
          %v959 = vadd.f32 %v903, %v943
          %v960 = vadd.f32 %v904, %v944
          %v961 = vadd.f32 %v905, %v945
          %v962 = vadd.f32 %v906, %v946
          %v963 = vsub.f32 %v955, %v787
          %v964 = vsub.f32 %v956, %v788
          %v965 = vsub.f32 %v957, %v789
          %v966 = vsub.f32 %v958, %v790
          %v967 = vsub.f32 %v959, %v791
          %v968 = vsub.f32 %v960, %v792
          %v969 = vsub.f32 %v961, %v793
          %v970 = vsub.f32 %v962, %v794
          %v971 = vmul.f32 %v558, %v963
          %v972 = vmul.f32 %v558, %v964
          %v973 = vmul.f32 %v558, %v965
          %v974 = vmul.f32 %v558, %v966
          %v975 = vmul.f32 %v558, %v967
          %v976 = vmul.f32 %v558, %v968
          %v977 = vmul.f32 %v558, %v969
          %v978 = vmul.f32 %v558, %v970
          %v979 = vadd.f32 %v787, %v971
          %v980 = vadd.f32 %v788, %v972
          %v981 = vadd.f32 %v789, %v973
          %v982 = vadd.f32 %v790, %v974
          %v983 = vadd.f32 %v791, %v975
          %v984 = vadd.f32 %v792, %v976
          %v985 = vadd.f32 %v793, %v977
          %v986 = vadd.f32 %v794, %v978
          %v987 = vshrl.u32 %v626, 8
          %v988 = vshrl.u32 %v627, 8
          %v989 = vshrl.u32 %v628, 8
          %v990 = vshrl.u32 %v629, 8
          %v991 = vshrl.u32 %v630, 8
          %v992 = vshrl.u32 %v631, 8
          %v993 = vshrl.u32 %v632, 8
          %v994 = vshrl.u32 %v633, 8
          %v995 = vand.u32 %v987, 8
          %v996 = vand.u32 %v988, 8
          %v997 = vand.u32 %v989, 8
          %v998 = vand.u32 %v990, 8
          %v999 = vand.u32 %v991, 8
          %v1000 = vand.u32 %v992, 8
          %v1001 = vand.u32 %v993, 8
          %v1002 = vand.u32 %v994, 8
          %vm1003 = vcmp.eq.s32.totalorder %v995, 0
          %vm1004 = vcmp.eq.s32.totalorder %v996, 0
          %vm1005 = vcmp.eq.s32.totalorder %v997, 0
          %vm1006 = vcmp.eq.s32.totalorder %v998, 0
          %vm1007 = vcmp.eq.s32.totalorder %v999, 0
          %vm1008 = vcmp.eq.s32.totalorder %v1000, 0
          %vm1009 = vcmp.eq.s32.totalorder %v1001, 0
          %vm1010 = vcmp.eq.s32.totalorder %v1002, 0
          %v1011 = vsel %vm1003, %v535, %v616
          %v1012 = vsel %vm1004, %v535, %v617
          %v1013 = vsel %vm1005, %v535, %v618
          %v1014 = vsel %vm1006, %v535, %v619
          %v1015 = vsel %vm1007, %v535, %v620
          %v1016 = vsel %vm1008, %v535, %v621
          %v1017 = vsel %vm1009, %v535, %v622
          %v1018 = vsel %vm1010, %v535, %v623
          %v1019 = vand.u32 %v987, 12
          %v1020 = vand.u32 %v988, 12
          %v1021 = vand.u32 %v989, 12
          %v1022 = vand.u32 %v990, 12
          %v1023 = vand.u32 %v991, 12
          %v1024 = vand.u32 %v992, 12
          %v1025 = vand.u32 %v993, 12
          %v1026 = vand.u32 %v994, 12
          %vm1027 = vcmp.eq.s32.totalorder %v1019, 0
          %vm1028 = vcmp.eq.s32.totalorder %v1020, 0
          %vm1029 = vcmp.eq.s32.totalorder %v1021, 0
          %vm1030 = vcmp.eq.s32.totalorder %v1022, 0
          %vm1031 = vcmp.eq.s32.totalorder %v1023, 0
          %vm1032 = vcmp.eq.s32.totalorder %v1024, 0
          %vm1033 = vcmp.eq.s32.totalorder %v1025, 0
          %vm1034 = vcmp.eq.s32.totalorder %v1026, 0
          %v1035 = vand.u32 %v987, 13
          %v1036 = vand.u32 %v988, 13
          %v1037 = vand.u32 %v989, 13
          %v1038 = vand.u32 %v990, 13
          %v1039 = vand.u32 %v991, 13
          %v1040 = vand.u32 %v992, 13
          %v1041 = vand.u32 %v993, 13
          %v1042 = vand.u32 %v994, 13
          %vm1043 = vcmp.eq.s32.totalorder %v1035, 12
          %vm1044 = vcmp.eq.s32.totalorder %v1036, 12
          %vm1045 = vcmp.eq.s32.totalorder %v1037, 12
          %vm1046 = vcmp.eq.s32.totalorder %v1038, 12
          %vm1047 = vcmp.eq.s32.totalorder %v1039, 12
          %vm1048 = vcmp.eq.s32.totalorder %v1040, 12
          %vm1049 = vcmp.eq.s32.totalorder %v1041, 12
          %vm1050 = vcmp.eq.s32.totalorder %v1042, 12
          %v1051 = vsel %vm1043, %v535, %v690
          %v1052 = vsel %vm1044, %v535, %v690
          %v1053 = vsel %vm1045, %v535, %v690
          %v1054 = vsel %vm1046, %v535, %v690
          %v1055 = vsel %vm1047, %v535, %v690
          %v1056 = vsel %vm1048, %v535, %v690
          %v1057 = vsel %vm1049, %v535, %v690
          %v1058 = vsel %vm1050, %v535, %v690
          %v1059 = vsel %vm1027, %v616, %v1051
          %v1060 = vsel %vm1028, %v617, %v1052
          %v1061 = vsel %vm1029, %v618, %v1053
          %v1062 = vsel %vm1030, %v619, %v1054
          %v1063 = vsel %vm1031, %v620, %v1055
          %v1064 = vsel %vm1032, %v621, %v1056
          %v1065 = vsel %vm1033, %v622, %v1057
          %v1066 = vsel %vm1034, %v623, %v1058
          %v1075 = vand.u32 %v987, 1
          %v1076 = vand.u32 %v988, 1
          %v1077 = vand.u32 %v989, 1
          %v1078 = vand.u32 %v990, 1
          %v1079 = vand.u32 %v991, 1
          %v1080 = vand.u32 %v992, 1
          %v1081 = vand.u32 %v993, 1
          %v1082 = vand.u32 %v994, 1
          %v1083 = vshll.u32 %v1075, 31
          %v1084 = vshll.u32 %v1076, 31
          %v1085 = vshll.u32 %v1077, 31
          %v1086 = vshll.u32 %v1078, 31
          %v1087 = vshll.u32 %v1079, 31
          %v1088 = vshll.u32 %v1080, 31
          %v1089 = vshll.u32 %v1081, 31
          %v1090 = vshll.u32 %v1082, 31
          %v1091 = vxor.u32 %v1011, %v1083
          %v1092 = vxor.u32 %v1012, %v1084
          %v1093 = vxor.u32 %v1013, %v1085
          %v1094 = vxor.u32 %v1014, %v1086
          %v1095 = vxor.u32 %v1015, %v1087
          %v1096 = vxor.u32 %v1016, %v1088
          %v1097 = vxor.u32 %v1017, %v1089
          %v1098 = vxor.u32 %v1018, %v1090
          %v1115 = vand.u32 %v987, 2
          %v1116 = vand.u32 %v988, 2
          %v1117 = vand.u32 %v989, 2
          %v1118 = vand.u32 %v990, 2
          %v1119 = vand.u32 %v991, 2
          %v1120 = vand.u32 %v992, 2
          %v1121 = vand.u32 %v993, 2
          %v1122 = vand.u32 %v994, 2
          %v1123 = vshll.u32 %v1115, 30
          %v1124 = vshll.u32 %v1116, 30
          %v1125 = vshll.u32 %v1117, 30
          %v1126 = vshll.u32 %v1118, 30
          %v1127 = vshll.u32 %v1119, 30
          %v1128 = vshll.u32 %v1120, 30
          %v1129 = vshll.u32 %v1121, 30
          %v1130 = vshll.u32 %v1122, 30
          %v1131 = vxor.u32 %v1059, %v1123
          %v1132 = vxor.u32 %v1060, %v1124
          %v1133 = vxor.u32 %v1061, %v1125
          %v1134 = vxor.u32 %v1062, %v1126
          %v1135 = vxor.u32 %v1063, %v1127
          %v1136 = vxor.u32 %v1064, %v1128
          %v1137 = vxor.u32 %v1065, %v1129
          %v1138 = vxor.u32 %v1066, %v1130
          %v1147 = vadd.f32 %v1091, %v1131
          %v1148 = vadd.f32 %v1092, %v1132
          %v1149 = vadd.f32 %v1093, %v1133
          %v1150 = vadd.f32 %v1094, %v1134
          %v1151 = vadd.f32 %v1095, %v1135
          %v1152 = vadd.f32 %v1096, %v1136
          %v1153 = vadd.f32 %v1097, %v1137
          %v1154 = vadd.f32 %v1098, %v1138
          %v1155 = vshrl.u32 %v626, 12
          %v1156 = vshrl.u32 %v627, 12
          %v1157 = vshrl.u32 %v628, 12
          %v1158 = vshrl.u32 %v629, 12
          %v1159 = vshrl.u32 %v630, 12
          %v1160 = vshrl.u32 %v631, 12
          %v1161 = vshrl.u32 %v632, 12
          %v1162 = vshrl.u32 %v633, 12
          %v1163 = vand.u32 %v1155, 8
          %v1164 = vand.u32 %v1156, 8
          %v1165 = vand.u32 %v1157, 8
          %v1166 = vand.u32 %v1158, 8
          %v1167 = vand.u32 %v1159, 8
          %v1168 = vand.u32 %v1160, 8
          %v1169 = vand.u32 %v1161, 8
          %v1170 = vand.u32 %v1162, 8
          %vm1171 = vcmp.eq.s32.totalorder %v1163, 0
          %vm1172 = vcmp.eq.s32.totalorder %v1164, 0
          %vm1173 = vcmp.eq.s32.totalorder %v1165, 0
          %vm1174 = vcmp.eq.s32.totalorder %v1166, 0
          %vm1175 = vcmp.eq.s32.totalorder %v1167, 0
          %vm1176 = vcmp.eq.s32.totalorder %v1168, 0
          %vm1177 = vcmp.eq.s32.totalorder %v1169, 0
          %vm1178 = vcmp.eq.s32.totalorder %v1170, 0
          %v1179 = vsel %vm1171, %v615, %v616
          %v1180 = vsel %vm1172, %v615, %v617
          %v1181 = vsel %vm1173, %v615, %v618
          %v1182 = vsel %vm1174, %v615, %v619
          %v1183 = vsel %vm1175, %v615, %v620
          %v1184 = vsel %vm1176, %v615, %v621
          %v1185 = vsel %vm1177, %v615, %v622
          %v1186 = vsel %vm1178, %v615, %v623
          %v1187 = vand.u32 %v1155, 12
          %v1188 = vand.u32 %v1156, 12
          %v1189 = vand.u32 %v1157, 12
          %v1190 = vand.u32 %v1158, 12
          %v1191 = vand.u32 %v1159, 12
          %v1192 = vand.u32 %v1160, 12
          %v1193 = vand.u32 %v1161, 12
          %v1194 = vand.u32 %v1162, 12
          %vm1195 = vcmp.eq.s32.totalorder %v1187, 0
          %vm1196 = vcmp.eq.s32.totalorder %v1188, 0
          %vm1197 = vcmp.eq.s32.totalorder %v1189, 0
          %vm1198 = vcmp.eq.s32.totalorder %v1190, 0
          %vm1199 = vcmp.eq.s32.totalorder %v1191, 0
          %vm1200 = vcmp.eq.s32.totalorder %v1192, 0
          %vm1201 = vcmp.eq.s32.totalorder %v1193, 0
          %vm1202 = vcmp.eq.s32.totalorder %v1194, 0
          %v1203 = vand.u32 %v1155, 13
          %v1204 = vand.u32 %v1156, 13
          %v1205 = vand.u32 %v1157, 13
          %v1206 = vand.u32 %v1158, 13
          %v1207 = vand.u32 %v1159, 13
          %v1208 = vand.u32 %v1160, 13
          %v1209 = vand.u32 %v1161, 13
          %v1210 = vand.u32 %v1162, 13
          %vm1211 = vcmp.eq.s32.totalorder %v1203, 12
          %vm1212 = vcmp.eq.s32.totalorder %v1204, 12
          %vm1213 = vcmp.eq.s32.totalorder %v1205, 12
          %vm1214 = vcmp.eq.s32.totalorder %v1206, 12
          %vm1215 = vcmp.eq.s32.totalorder %v1207, 12
          %vm1216 = vcmp.eq.s32.totalorder %v1208, 12
          %vm1217 = vcmp.eq.s32.totalorder %v1209, 12
          %vm1218 = vcmp.eq.s32.totalorder %v1210, 12
          %v1219 = vsel %vm1211, %v615, %v690
          %v1220 = vsel %vm1212, %v615, %v690
          %v1221 = vsel %vm1213, %v615, %v690
          %v1222 = vsel %vm1214, %v615, %v690
          %v1223 = vsel %vm1215, %v615, %v690
          %v1224 = vsel %vm1216, %v615, %v690
          %v1225 = vsel %vm1217, %v615, %v690
          %v1226 = vsel %vm1218, %v615, %v690
          %v1227 = vsel %vm1195, %v616, %v1219
          %v1228 = vsel %vm1196, %v617, %v1220
          %v1229 = vsel %vm1197, %v618, %v1221
          %v1230 = vsel %vm1198, %v619, %v1222
          %v1231 = vsel %vm1199, %v620, %v1223
          %v1232 = vsel %vm1200, %v621, %v1224
          %v1233 = vsel %vm1201, %v622, %v1225
          %v1234 = vsel %vm1202, %v623, %v1226
          %v1243 = vand.u32 %v1155, 1
          %v1244 = vand.u32 %v1156, 1
          %v1245 = vand.u32 %v1157, 1
          %v1246 = vand.u32 %v1158, 1
          %v1247 = vand.u32 %v1159, 1
          %v1248 = vand.u32 %v1160, 1
          %v1249 = vand.u32 %v1161, 1
          %v1250 = vand.u32 %v1162, 1
          %v1251 = vshll.u32 %v1243, 31
          %v1252 = vshll.u32 %v1244, 31
          %v1253 = vshll.u32 %v1245, 31
          %v1254 = vshll.u32 %v1246, 31
          %v1255 = vshll.u32 %v1247, 31
          %v1256 = vshll.u32 %v1248, 31
          %v1257 = vshll.u32 %v1249, 31
          %v1258 = vshll.u32 %v1250, 31
          %v1259 = vxor.u32 %v1179, %v1251
          %v1260 = vxor.u32 %v1180, %v1252
          %v1261 = vxor.u32 %v1181, %v1253
          %v1262 = vxor.u32 %v1182, %v1254
          %v1263 = vxor.u32 %v1183, %v1255
          %v1264 = vxor.u32 %v1184, %v1256
          %v1265 = vxor.u32 %v1185, %v1257
          %v1266 = vxor.u32 %v1186, %v1258
          %v1283 = vand.u32 %v1155, 2
          %v1284 = vand.u32 %v1156, 2
          %v1285 = vand.u32 %v1157, 2
          %v1286 = vand.u32 %v1158, 2
          %v1287 = vand.u32 %v1159, 2
          %v1288 = vand.u32 %v1160, 2
          %v1289 = vand.u32 %v1161, 2
          %v1290 = vand.u32 %v1162, 2
          %v1291 = vshll.u32 %v1283, 30
          %v1292 = vshll.u32 %v1284, 30
          %v1293 = vshll.u32 %v1285, 30
          %v1294 = vshll.u32 %v1286, 30
          %v1295 = vshll.u32 %v1287, 30
          %v1296 = vshll.u32 %v1288, 30
          %v1297 = vshll.u32 %v1289, 30
          %v1298 = vshll.u32 %v1290, 30
          %v1299 = vxor.u32 %v1227, %v1291
          %v1300 = vxor.u32 %v1228, %v1292
          %v1301 = vxor.u32 %v1229, %v1293
          %v1302 = vxor.u32 %v1230, %v1294
          %v1303 = vxor.u32 %v1231, %v1295
          %v1304 = vxor.u32 %v1232, %v1296
          %v1305 = vxor.u32 %v1233, %v1297
          %v1306 = vxor.u32 %v1234, %v1298
          %v1315 = vadd.f32 %v1259, %v1299
          %v1316 = vadd.f32 %v1260, %v1300
          %v1317 = vadd.f32 %v1261, %v1301
          %v1318 = vadd.f32 %v1262, %v1302
          %v1319 = vadd.f32 %v1263, %v1303
          %v1320 = vadd.f32 %v1264, %v1304
          %v1321 = vadd.f32 %v1265, %v1305
          %v1322 = vadd.f32 %v1266, %v1306
          %v1323 = vsub.f32 %v1315, %v1147
          %v1324 = vsub.f32 %v1316, %v1148
          %v1325 = vsub.f32 %v1317, %v1149
          %v1326 = vsub.f32 %v1318, %v1150
          %v1327 = vsub.f32 %v1319, %v1151
          %v1328 = vsub.f32 %v1320, %v1152
          %v1329 = vsub.f32 %v1321, %v1153
          %v1330 = vsub.f32 %v1322, %v1154
          %v1331 = vmul.f32 %v558, %v1323
          %v1332 = vmul.f32 %v558, %v1324
          %v1333 = vmul.f32 %v558, %v1325
          %v1334 = vmul.f32 %v558, %v1326
          %v1335 = vmul.f32 %v558, %v1327
          %v1336 = vmul.f32 %v558, %v1328
          %v1337 = vmul.f32 %v558, %v1329
          %v1338 = vmul.f32 %v558, %v1330
          %v1339 = vadd.f32 %v1147, %v1331
          %v1340 = vadd.f32 %v1148, %v1332
          %v1341 = vadd.f32 %v1149, %v1333
          %v1342 = vadd.f32 %v1150, %v1334
          %v1343 = vadd.f32 %v1151, %v1335
          %v1344 = vadd.f32 %v1152, %v1336
          %v1345 = vadd.f32 %v1153, %v1337
          %v1346 = vadd.f32 %v1154, %v1338
          %v1347 = vsub.f32 %v1339, %v979
          %v1348 = vsub.f32 %v1340, %v980
          %v1349 = vsub.f32 %v1341, %v981
          %v1350 = vsub.f32 %v1342, %v982
          %v1351 = vsub.f32 %v1343, %v983
          %v1352 = vsub.f32 %v1344, %v984
          %v1353 = vsub.f32 %v1345, %v985
          %v1354 = vsub.f32 %v1346, %v986
          %v1355 = vmul.f32 %v607, %v1347
          %v1356 = vmul.f32 %v608, %v1348
          %v1357 = vmul.f32 %v609, %v1349
          %v1358 = vmul.f32 %v610, %v1350
          %v1359 = vmul.f32 %v611, %v1351
          %v1360 = vmul.f32 %v612, %v1352
          %v1361 = vmul.f32 %v613, %v1353
          %v1362 = vmul.f32 %v614, %v1354
          %v1363 = vadd.f32 %v979, %v1355
          %v1364 = vadd.f32 %v980, %v1356
          %v1365 = vadd.f32 %v981, %v1357
          %v1366 = vadd.f32 %v982, %v1358
          %v1367 = vadd.f32 %v983, %v1359
          %v1368 = vadd.f32 %v984, %v1360
          %v1369 = vadd.f32 %v985, %v1361
          %v1370 = vadd.f32 %v986, %v1362
          %v1371 = vshrl.u32 %v626, 16
          %v1372 = vshrl.u32 %v627, 16
          %v1373 = vshrl.u32 %v628, 16
          %v1374 = vshrl.u32 %v629, 16
          %v1375 = vshrl.u32 %v630, 16
          %v1376 = vshrl.u32 %v631, 16
          %v1377 = vshrl.u32 %v632, 16
          %v1378 = vshrl.u32 %v633, 16
          %v1379 = vand.u32 %v1371, 8
          %v1380 = vand.u32 %v1372, 8
          %v1381 = vand.u32 %v1373, 8
          %v1382 = vand.u32 %v1374, 8
          %v1383 = vand.u32 %v1375, 8
          %v1384 = vand.u32 %v1376, 8
          %v1385 = vand.u32 %v1377, 8
          %v1386 = vand.u32 %v1378, 8
          %vm1387 = vcmp.eq.s32.totalorder %v1379, 0
          %vm1388 = vcmp.eq.s32.totalorder %v1380, 0
          %vm1389 = vcmp.eq.s32.totalorder %v1381, 0
          %vm1390 = vcmp.eq.s32.totalorder %v1382, 0
          %vm1391 = vcmp.eq.s32.totalorder %v1383, 0
          %vm1392 = vcmp.eq.s32.totalorder %v1384, 0
          %vm1393 = vcmp.eq.s32.totalorder %v1385, 0
          %vm1394 = vcmp.eq.s32.totalorder %v1386, 0
          %v1395 = vsel %vm1387, %v535, %v544
          %v1396 = vsel %vm1388, %v535, %v545
          %v1397 = vsel %vm1389, %v535, %v546
          %v1398 = vsel %vm1390, %v535, %v547
          %v1399 = vsel %vm1391, %v535, %v548
          %v1400 = vsel %vm1392, %v535, %v549
          %v1401 = vsel %vm1393, %v535, %v550
          %v1402 = vsel %vm1394, %v535, %v551
          %v1403 = vand.u32 %v1371, 12
          %v1404 = vand.u32 %v1372, 12
          %v1405 = vand.u32 %v1373, 12
          %v1406 = vand.u32 %v1374, 12
          %v1407 = vand.u32 %v1375, 12
          %v1408 = vand.u32 %v1376, 12
          %v1409 = vand.u32 %v1377, 12
          %v1410 = vand.u32 %v1378, 12
          %vm1411 = vcmp.eq.s32.totalorder %v1403, 0
          %vm1412 = vcmp.eq.s32.totalorder %v1404, 0
          %vm1413 = vcmp.eq.s32.totalorder %v1405, 0
          %vm1414 = vcmp.eq.s32.totalorder %v1406, 0
          %vm1415 = vcmp.eq.s32.totalorder %v1407, 0
          %vm1416 = vcmp.eq.s32.totalorder %v1408, 0
          %vm1417 = vcmp.eq.s32.totalorder %v1409, 0
          %vm1418 = vcmp.eq.s32.totalorder %v1410, 0
          %v1419 = vand.u32 %v1371, 13
          %v1420 = vand.u32 %v1372, 13
          %v1421 = vand.u32 %v1373, 13
          %v1422 = vand.u32 %v1374, 13
          %v1423 = vand.u32 %v1375, 13
          %v1424 = vand.u32 %v1376, 13
          %v1425 = vand.u32 %v1377, 13
          %v1426 = vand.u32 %v1378, 13
          %vm1427 = vcmp.eq.s32.totalorder %v1419, 12
          %vm1428 = vcmp.eq.s32.totalorder %v1420, 12
          %vm1429 = vcmp.eq.s32.totalorder %v1421, 12
          %vm1430 = vcmp.eq.s32.totalorder %v1422, 12
          %vm1431 = vcmp.eq.s32.totalorder %v1423, 12
          %vm1432 = vcmp.eq.s32.totalorder %v1424, 12
          %vm1433 = vcmp.eq.s32.totalorder %v1425, 12
          %vm1434 = vcmp.eq.s32.totalorder %v1426, 12
          %v1435 = vstv %s512
          %v1436 = vsel %vm1427, %v535, %v1435
          %v1437 = vsel %vm1428, %v535, %v1435
          %v1438 = vsel %vm1429, %v535, %v1435
          %v1439 = vsel %vm1430, %v535, %v1435
          %v1440 = vsel %vm1431, %v535, %v1435
          %v1441 = vsel %vm1432, %v535, %v1435
          %v1442 = vsel %vm1433, %v535, %v1435
          %v1443 = vsel %vm1434, %v535, %v1435
          %v1444 = vsel %vm1411, %v544, %v1436
          %v1445 = vsel %vm1412, %v545, %v1437
          %v1446 = vsel %vm1413, %v546, %v1438
          %v1447 = vsel %vm1414, %v547, %v1439
          %v1448 = vsel %vm1415, %v548, %v1440
          %v1449 = vsel %vm1416, %v549, %v1441
          %v1450 = vsel %vm1417, %v550, %v1442
          %v1451 = vsel %vm1418, %v551, %v1443
          %v1460 = vand.u32 %v1371, 1
          %v1461 = vand.u32 %v1372, 1
          %v1462 = vand.u32 %v1373, 1
          %v1463 = vand.u32 %v1374, 1
          %v1464 = vand.u32 %v1375, 1
          %v1465 = vand.u32 %v1376, 1
          %v1466 = vand.u32 %v1377, 1
          %v1467 = vand.u32 %v1378, 1
          %v1468 = vshll.u32 %v1460, 31
          %v1469 = vshll.u32 %v1461, 31
          %v1470 = vshll.u32 %v1462, 31
          %v1471 = vshll.u32 %v1463, 31
          %v1472 = vshll.u32 %v1464, 31
          %v1473 = vshll.u32 %v1465, 31
          %v1474 = vshll.u32 %v1466, 31
          %v1475 = vshll.u32 %v1467, 31
          %v1476 = vxor.u32 %v1395, %v1468
          %v1477 = vxor.u32 %v1396, %v1469
          %v1478 = vxor.u32 %v1397, %v1470
          %v1479 = vxor.u32 %v1398, %v1471
          %v1480 = vxor.u32 %v1399, %v1472
          %v1481 = vxor.u32 %v1400, %v1473
          %v1482 = vxor.u32 %v1401, %v1474
          %v1483 = vxor.u32 %v1402, %v1475
          %v1500 = vand.u32 %v1371, 2
          %v1501 = vand.u32 %v1372, 2
          %v1502 = vand.u32 %v1373, 2
          %v1503 = vand.u32 %v1374, 2
          %v1504 = vand.u32 %v1375, 2
          %v1505 = vand.u32 %v1376, 2
          %v1506 = vand.u32 %v1377, 2
          %v1507 = vand.u32 %v1378, 2
          %v1508 = vshll.u32 %v1500, 30
          %v1509 = vshll.u32 %v1501, 30
          %v1510 = vshll.u32 %v1502, 30
          %v1511 = vshll.u32 %v1503, 30
          %v1512 = vshll.u32 %v1504, 30
          %v1513 = vshll.u32 %v1505, 30
          %v1514 = vshll.u32 %v1506, 30
          %v1515 = vshll.u32 %v1507, 30
          %v1516 = vxor.u32 %v1444, %v1508
          %v1517 = vxor.u32 %v1445, %v1509
          %v1518 = vxor.u32 %v1446, %v1510
          %v1519 = vxor.u32 %v1447, %v1511
          %v1520 = vxor.u32 %v1448, %v1512
          %v1521 = vxor.u32 %v1449, %v1513
          %v1522 = vxor.u32 %v1450, %v1514
          %v1523 = vxor.u32 %v1451, %v1515
          %v1532 = vadd.f32 %v1476, %v1516
          %v1533 = vadd.f32 %v1477, %v1517
          %v1534 = vadd.f32 %v1478, %v1518
          %v1535 = vadd.f32 %v1479, %v1519
          %v1536 = vadd.f32 %v1480, %v1520
          %v1537 = vadd.f32 %v1481, %v1521
          %v1538 = vadd.f32 %v1482, %v1522
          %v1539 = vadd.f32 %v1483, %v1523
          %v1540 = vshrl.u32 %v626, 20
          %v1541 = vshrl.u32 %v627, 20
          %v1542 = vshrl.u32 %v628, 20
          %v1543 = vshrl.u32 %v629, 20
          %v1544 = vshrl.u32 %v630, 20
          %v1545 = vshrl.u32 %v631, 20
          %v1546 = vshrl.u32 %v632, 20
          %v1547 = vshrl.u32 %v633, 20
          %v1548 = vand.u32 %v1540, 8
          %v1549 = vand.u32 %v1541, 8
          %v1550 = vand.u32 %v1542, 8
          %v1551 = vand.u32 %v1543, 8
          %v1552 = vand.u32 %v1544, 8
          %v1553 = vand.u32 %v1545, 8
          %v1554 = vand.u32 %v1546, 8
          %v1555 = vand.u32 %v1547, 8
          %vm1556 = vcmp.eq.s32.totalorder %v1548, 0
          %vm1557 = vcmp.eq.s32.totalorder %v1549, 0
          %vm1558 = vcmp.eq.s32.totalorder %v1550, 0
          %vm1559 = vcmp.eq.s32.totalorder %v1551, 0
          %vm1560 = vcmp.eq.s32.totalorder %v1552, 0
          %vm1561 = vcmp.eq.s32.totalorder %v1553, 0
          %vm1562 = vcmp.eq.s32.totalorder %v1554, 0
          %vm1563 = vcmp.eq.s32.totalorder %v1555, 0
          %v1564 = vsel %vm1556, %v615, %v544
          %v1565 = vsel %vm1557, %v615, %v545
          %v1566 = vsel %vm1558, %v615, %v546
          %v1567 = vsel %vm1559, %v615, %v547
          %v1568 = vsel %vm1560, %v615, %v548
          %v1569 = vsel %vm1561, %v615, %v549
          %v1570 = vsel %vm1562, %v615, %v550
          %v1571 = vsel %vm1563, %v615, %v551
          %v1572 = vand.u32 %v1540, 12
          %v1573 = vand.u32 %v1541, 12
          %v1574 = vand.u32 %v1542, 12
          %v1575 = vand.u32 %v1543, 12
          %v1576 = vand.u32 %v1544, 12
          %v1577 = vand.u32 %v1545, 12
          %v1578 = vand.u32 %v1546, 12
          %v1579 = vand.u32 %v1547, 12
          %vm1580 = vcmp.eq.s32.totalorder %v1572, 0
          %vm1581 = vcmp.eq.s32.totalorder %v1573, 0
          %vm1582 = vcmp.eq.s32.totalorder %v1574, 0
          %vm1583 = vcmp.eq.s32.totalorder %v1575, 0
          %vm1584 = vcmp.eq.s32.totalorder %v1576, 0
          %vm1585 = vcmp.eq.s32.totalorder %v1577, 0
          %vm1586 = vcmp.eq.s32.totalorder %v1578, 0
          %vm1587 = vcmp.eq.s32.totalorder %v1579, 0
          %v1588 = vand.u32 %v1540, 13
          %v1589 = vand.u32 %v1541, 13
          %v1590 = vand.u32 %v1542, 13
          %v1591 = vand.u32 %v1543, 13
          %v1592 = vand.u32 %v1544, 13
          %v1593 = vand.u32 %v1545, 13
          %v1594 = vand.u32 %v1546, 13
          %v1595 = vand.u32 %v1547, 13
          %vm1596 = vcmp.eq.s32.totalorder %v1588, 12
          %vm1597 = vcmp.eq.s32.totalorder %v1589, 12
          %vm1598 = vcmp.eq.s32.totalorder %v1590, 12
          %vm1599 = vcmp.eq.s32.totalorder %v1591, 12
          %vm1600 = vcmp.eq.s32.totalorder %v1592, 12
          %vm1601 = vcmp.eq.s32.totalorder %v1593, 12
          %vm1602 = vcmp.eq.s32.totalorder %v1594, 12
          %vm1603 = vcmp.eq.s32.totalorder %v1595, 12
          %v1604 = vsel %vm1596, %v615, %v1435
          %v1605 = vsel %vm1597, %v615, %v1435
          %v1606 = vsel %vm1598, %v615, %v1435
          %v1607 = vsel %vm1599, %v615, %v1435
          %v1608 = vsel %vm1600, %v615, %v1435
          %v1609 = vsel %vm1601, %v615, %v1435
          %v1610 = vsel %vm1602, %v615, %v1435
          %v1611 = vsel %vm1603, %v615, %v1435
          %v1612 = vsel %vm1580, %v544, %v1604
          %v1613 = vsel %vm1581, %v545, %v1605
          %v1614 = vsel %vm1582, %v546, %v1606
          %v1615 = vsel %vm1583, %v547, %v1607
          %v1616 = vsel %vm1584, %v548, %v1608
          %v1617 = vsel %vm1585, %v549, %v1609
          %v1618 = vsel %vm1586, %v550, %v1610
          %v1619 = vsel %vm1587, %v551, %v1611
          %v1628 = vand.u32 %v1540, 1
          %v1629 = vand.u32 %v1541, 1
          %v1630 = vand.u32 %v1542, 1
          %v1631 = vand.u32 %v1543, 1
          %v1632 = vand.u32 %v1544, 1
          %v1633 = vand.u32 %v1545, 1
          %v1634 = vand.u32 %v1546, 1
          %v1635 = vand.u32 %v1547, 1
          %v1636 = vshll.u32 %v1628, 31
          %v1637 = vshll.u32 %v1629, 31
          %v1638 = vshll.u32 %v1630, 31
          %v1639 = vshll.u32 %v1631, 31
          %v1640 = vshll.u32 %v1632, 31
          %v1641 = vshll.u32 %v1633, 31
          %v1642 = vshll.u32 %v1634, 31
          %v1643 = vshll.u32 %v1635, 31
          %v1644 = vxor.u32 %v1564, %v1636
          %v1645 = vxor.u32 %v1565, %v1637
          %v1646 = vxor.u32 %v1566, %v1638
          %v1647 = vxor.u32 %v1567, %v1639
          %v1648 = vxor.u32 %v1568, %v1640
          %v1649 = vxor.u32 %v1569, %v1641
          %v1650 = vxor.u32 %v1570, %v1642
          %v1651 = vxor.u32 %v1571, %v1643
          %v1668 = vand.u32 %v1540, 2
          %v1669 = vand.u32 %v1541, 2
          %v1670 = vand.u32 %v1542, 2
          %v1671 = vand.u32 %v1543, 2
          %v1672 = vand.u32 %v1544, 2
          %v1673 = vand.u32 %v1545, 2
          %v1674 = vand.u32 %v1546, 2
          %v1675 = vand.u32 %v1547, 2
          %v1676 = vshll.u32 %v1668, 30
          %v1677 = vshll.u32 %v1669, 30
          %v1678 = vshll.u32 %v1670, 30
          %v1679 = vshll.u32 %v1671, 30
          %v1680 = vshll.u32 %v1672, 30
          %v1681 = vshll.u32 %v1673, 30
          %v1682 = vshll.u32 %v1674, 30
          %v1683 = vshll.u32 %v1675, 30
          %v1684 = vxor.u32 %v1612, %v1676
          %v1685 = vxor.u32 %v1613, %v1677
          %v1686 = vxor.u32 %v1614, %v1678
          %v1687 = vxor.u32 %v1615, %v1679
          %v1688 = vxor.u32 %v1616, %v1680
          %v1689 = vxor.u32 %v1617, %v1681
          %v1690 = vxor.u32 %v1618, %v1682
          %v1691 = vxor.u32 %v1619, %v1683
          %v1700 = vadd.f32 %v1644, %v1684
          %v1701 = vadd.f32 %v1645, %v1685
          %v1702 = vadd.f32 %v1646, %v1686
          %v1703 = vadd.f32 %v1647, %v1687
          %v1704 = vadd.f32 %v1648, %v1688
          %v1705 = vadd.f32 %v1649, %v1689
          %v1706 = vadd.f32 %v1650, %v1690
          %v1707 = vadd.f32 %v1651, %v1691
          %v1708 = vsub.f32 %v1700, %v1532
          %v1709 = vsub.f32 %v1701, %v1533
          %v1710 = vsub.f32 %v1702, %v1534
          %v1711 = vsub.f32 %v1703, %v1535
          %v1712 = vsub.f32 %v1704, %v1536
          %v1713 = vsub.f32 %v1705, %v1537
          %v1714 = vsub.f32 %v1706, %v1538
          %v1715 = vsub.f32 %v1707, %v1539
          %v1716 = vmul.f32 %v558, %v1708
          %v1717 = vmul.f32 %v558, %v1709
          %v1718 = vmul.f32 %v558, %v1710
          %v1719 = vmul.f32 %v558, %v1711
          %v1720 = vmul.f32 %v558, %v1712
          %v1721 = vmul.f32 %v558, %v1713
          %v1722 = vmul.f32 %v558, %v1714
          %v1723 = vmul.f32 %v558, %v1715
          %v1724 = vadd.f32 %v1532, %v1716
          %v1725 = vadd.f32 %v1533, %v1717
          %v1726 = vadd.f32 %v1534, %v1718
          %v1727 = vadd.f32 %v1535, %v1719
          %v1728 = vadd.f32 %v1536, %v1720
          %v1729 = vadd.f32 %v1537, %v1721
          %v1730 = vadd.f32 %v1538, %v1722
          %v1731 = vadd.f32 %v1539, %v1723
          %v1732 = vshrl.u32 %v626, 24
          %v1733 = vshrl.u32 %v627, 24
          %v1734 = vshrl.u32 %v628, 24
          %v1735 = vshrl.u32 %v629, 24
          %v1736 = vshrl.u32 %v630, 24
          %v1737 = vshrl.u32 %v631, 24
          %v1738 = vshrl.u32 %v632, 24
          %v1739 = vshrl.u32 %v633, 24
          %v1740 = vand.u32 %v1732, 8
          %v1741 = vand.u32 %v1733, 8
          %v1742 = vand.u32 %v1734, 8
          %v1743 = vand.u32 %v1735, 8
          %v1744 = vand.u32 %v1736, 8
          %v1745 = vand.u32 %v1737, 8
          %v1746 = vand.u32 %v1738, 8
          %v1747 = vand.u32 %v1739, 8
          %vm1748 = vcmp.eq.s32.totalorder %v1740, 0
          %vm1749 = vcmp.eq.s32.totalorder %v1741, 0
          %vm1750 = vcmp.eq.s32.totalorder %v1742, 0
          %vm1751 = vcmp.eq.s32.totalorder %v1743, 0
          %vm1752 = vcmp.eq.s32.totalorder %v1744, 0
          %vm1753 = vcmp.eq.s32.totalorder %v1745, 0
          %vm1754 = vcmp.eq.s32.totalorder %v1746, 0
          %vm1755 = vcmp.eq.s32.totalorder %v1747, 0
          %v1756 = vsel %vm1748, %v535, %v616
          %v1757 = vsel %vm1749, %v535, %v617
          %v1758 = vsel %vm1750, %v535, %v618
          %v1759 = vsel %vm1751, %v535, %v619
          %v1760 = vsel %vm1752, %v535, %v620
          %v1761 = vsel %vm1753, %v535, %v621
          %v1762 = vsel %vm1754, %v535, %v622
          %v1763 = vsel %vm1755, %v535, %v623
          %v1764 = vand.u32 %v1732, 12
          %v1765 = vand.u32 %v1733, 12
          %v1766 = vand.u32 %v1734, 12
          %v1767 = vand.u32 %v1735, 12
          %v1768 = vand.u32 %v1736, 12
          %v1769 = vand.u32 %v1737, 12
          %v1770 = vand.u32 %v1738, 12
          %v1771 = vand.u32 %v1739, 12
          %vm1772 = vcmp.eq.s32.totalorder %v1764, 0
          %vm1773 = vcmp.eq.s32.totalorder %v1765, 0
          %vm1774 = vcmp.eq.s32.totalorder %v1766, 0
          %vm1775 = vcmp.eq.s32.totalorder %v1767, 0
          %vm1776 = vcmp.eq.s32.totalorder %v1768, 0
          %vm1777 = vcmp.eq.s32.totalorder %v1769, 0
          %vm1778 = vcmp.eq.s32.totalorder %v1770, 0
          %vm1779 = vcmp.eq.s32.totalorder %v1771, 0
          %v1780 = vand.u32 %v1732, 13
          %v1781 = vand.u32 %v1733, 13
          %v1782 = vand.u32 %v1734, 13
          %v1783 = vand.u32 %v1735, 13
          %v1784 = vand.u32 %v1736, 13
          %v1785 = vand.u32 %v1737, 13
          %v1786 = vand.u32 %v1738, 13
          %v1787 = vand.u32 %v1739, 13
          %vm1788 = vcmp.eq.s32.totalorder %v1780, 12
          %vm1789 = vcmp.eq.s32.totalorder %v1781, 12
          %vm1790 = vcmp.eq.s32.totalorder %v1782, 12
          %vm1791 = vcmp.eq.s32.totalorder %v1783, 12
          %vm1792 = vcmp.eq.s32.totalorder %v1784, 12
          %vm1793 = vcmp.eq.s32.totalorder %v1785, 12
          %vm1794 = vcmp.eq.s32.totalorder %v1786, 12
          %vm1795 = vcmp.eq.s32.totalorder %v1787, 12
          %v1796 = vsel %vm1788, %v535, %v1435
          %v1797 = vsel %vm1789, %v535, %v1435
          %v1798 = vsel %vm1790, %v535, %v1435
          %v1799 = vsel %vm1791, %v535, %v1435
          %v1800 = vsel %vm1792, %v535, %v1435
          %v1801 = vsel %vm1793, %v535, %v1435
          %v1802 = vsel %vm1794, %v535, %v1435
          %v1803 = vsel %vm1795, %v535, %v1435
          %v1804 = vsel %vm1772, %v616, %v1796
          %v1805 = vsel %vm1773, %v617, %v1797
          %v1806 = vsel %vm1774, %v618, %v1798
          %v1807 = vsel %vm1775, %v619, %v1799
          %v1808 = vsel %vm1776, %v620, %v1800
          %v1809 = vsel %vm1777, %v621, %v1801
          %v1810 = vsel %vm1778, %v622, %v1802
          %v1811 = vsel %vm1779, %v623, %v1803
          %v1820 = vand.u32 %v1732, 1
          %v1821 = vand.u32 %v1733, 1
          %v1822 = vand.u32 %v1734, 1
          %v1823 = vand.u32 %v1735, 1
          %v1824 = vand.u32 %v1736, 1
          %v1825 = vand.u32 %v1737, 1
          %v1826 = vand.u32 %v1738, 1
          %v1827 = vand.u32 %v1739, 1
          %v1828 = vshll.u32 %v1820, 31
          %v1829 = vshll.u32 %v1821, 31
          %v1830 = vshll.u32 %v1822, 31
          %v1831 = vshll.u32 %v1823, 31
          %v1832 = vshll.u32 %v1824, 31
          %v1833 = vshll.u32 %v1825, 31
          %v1834 = vshll.u32 %v1826, 31
          %v1835 = vshll.u32 %v1827, 31
          %v1836 = vxor.u32 %v1756, %v1828
          %v1837 = vxor.u32 %v1757, %v1829
          %v1838 = vxor.u32 %v1758, %v1830
          %v1839 = vxor.u32 %v1759, %v1831
          %v1840 = vxor.u32 %v1760, %v1832
          %v1841 = vxor.u32 %v1761, %v1833
          %v1842 = vxor.u32 %v1762, %v1834
          %v1843 = vxor.u32 %v1763, %v1835
          %v1860 = vand.u32 %v1732, 2
          %v1861 = vand.u32 %v1733, 2
          %v1862 = vand.u32 %v1734, 2
          %v1863 = vand.u32 %v1735, 2
          %v1864 = vand.u32 %v1736, 2
          %v1865 = vand.u32 %v1737, 2
          %v1866 = vand.u32 %v1738, 2
          %v1867 = vand.u32 %v1739, 2
          %v1868 = vshll.u32 %v1860, 30
          %v1869 = vshll.u32 %v1861, 30
          %v1870 = vshll.u32 %v1862, 30
          %v1871 = vshll.u32 %v1863, 30
          %v1872 = vshll.u32 %v1864, 30
          %v1873 = vshll.u32 %v1865, 30
          %v1874 = vshll.u32 %v1866, 30
          %v1875 = vshll.u32 %v1867, 30
          %v1876 = vxor.u32 %v1804, %v1868
          %v1877 = vxor.u32 %v1805, %v1869
          %v1878 = vxor.u32 %v1806, %v1870
          %v1879 = vxor.u32 %v1807, %v1871
          %v1880 = vxor.u32 %v1808, %v1872
          %v1881 = vxor.u32 %v1809, %v1873
          %v1882 = vxor.u32 %v1810, %v1874
          %v1883 = vxor.u32 %v1811, %v1875
          %v1892 = vadd.f32 %v1836, %v1876
          %v1893 = vadd.f32 %v1837, %v1877
          %v1894 = vadd.f32 %v1838, %v1878
          %v1895 = vadd.f32 %v1839, %v1879
          %v1896 = vadd.f32 %v1840, %v1880
          %v1897 = vadd.f32 %v1841, %v1881
          %v1898 = vadd.f32 %v1842, %v1882
          %v1899 = vadd.f32 %v1843, %v1883
          %v1900 = vshrl.u32 %v626, 28
          %v1901 = vshrl.u32 %v627, 28
          %v1902 = vshrl.u32 %v628, 28
          %v1903 = vshrl.u32 %v629, 28
          %v1904 = vshrl.u32 %v630, 28
          %v1905 = vshrl.u32 %v631, 28
          %v1906 = vshrl.u32 %v632, 28
          %v1907 = vshrl.u32 %v633, 28
          %v1908 = vand.u32 %v1900, 8
          %v1909 = vand.u32 %v1901, 8
          %v1910 = vand.u32 %v1902, 8
          %v1911 = vand.u32 %v1903, 8
          %v1912 = vand.u32 %v1904, 8
          %v1913 = vand.u32 %v1905, 8
          %v1914 = vand.u32 %v1906, 8
          %v1915 = vand.u32 %v1907, 8
          %vm1916 = vcmp.eq.s32.totalorder %v1908, 0
          %vm1917 = vcmp.eq.s32.totalorder %v1909, 0
          %vm1918 = vcmp.eq.s32.totalorder %v1910, 0
          %vm1919 = vcmp.eq.s32.totalorder %v1911, 0
          %vm1920 = vcmp.eq.s32.totalorder %v1912, 0
          %vm1921 = vcmp.eq.s32.totalorder %v1913, 0
          %vm1922 = vcmp.eq.s32.totalorder %v1914, 0
          %vm1923 = vcmp.eq.s32.totalorder %v1915, 0
          %v1924 = vsel %vm1916, %v615, %v616
          %v1925 = vsel %vm1917, %v615, %v617
          %v1926 = vsel %vm1918, %v615, %v618
          %v1927 = vsel %vm1919, %v615, %v619
          %v1928 = vsel %vm1920, %v615, %v620
          %v1929 = vsel %vm1921, %v615, %v621
          %v1930 = vsel %vm1922, %v615, %v622
          %v1931 = vsel %vm1923, %v615, %v623
          %v1932 = vand.u32 %v1900, 12
          %v1933 = vand.u32 %v1901, 12
          %v1934 = vand.u32 %v1902, 12
          %v1935 = vand.u32 %v1903, 12
          %v1936 = vand.u32 %v1904, 12
          %v1937 = vand.u32 %v1905, 12
          %v1938 = vand.u32 %v1906, 12
          %v1939 = vand.u32 %v1907, 12
          %vm1940 = vcmp.eq.s32.totalorder %v1932, 0
          %vm1941 = vcmp.eq.s32.totalorder %v1933, 0
          %vm1942 = vcmp.eq.s32.totalorder %v1934, 0
          %vm1943 = vcmp.eq.s32.totalorder %v1935, 0
          %vm1944 = vcmp.eq.s32.totalorder %v1936, 0
          %vm1945 = vcmp.eq.s32.totalorder %v1937, 0
          %vm1946 = vcmp.eq.s32.totalorder %v1938, 0
          %vm1947 = vcmp.eq.s32.totalorder %v1939, 0
          %v1948 = vand.u32 %v1900, 13
          %v1949 = vand.u32 %v1901, 13
          %v1950 = vand.u32 %v1902, 13
          %v1951 = vand.u32 %v1903, 13
          %v1952 = vand.u32 %v1904, 13
          %v1953 = vand.u32 %v1905, 13
          %v1954 = vand.u32 %v1906, 13
          %v1955 = vand.u32 %v1907, 13
          %vm1956 = vcmp.eq.s32.totalorder %v1948, 12
          %vm1957 = vcmp.eq.s32.totalorder %v1949, 12
          %vm1958 = vcmp.eq.s32.totalorder %v1950, 12
          %vm1959 = vcmp.eq.s32.totalorder %v1951, 12
          %vm1960 = vcmp.eq.s32.totalorder %v1952, 12
          %vm1961 = vcmp.eq.s32.totalorder %v1953, 12
          %vm1962 = vcmp.eq.s32.totalorder %v1954, 12
          %vm1963 = vcmp.eq.s32.totalorder %v1955, 12
          %v1964 = vsel %vm1956, %v615, %v1435
          %v1965 = vsel %vm1957, %v615, %v1435
          %v1966 = vsel %vm1958, %v615, %v1435
          %v1967 = vsel %vm1959, %v615, %v1435
          %v1968 = vsel %vm1960, %v615, %v1435
          %v1969 = vsel %vm1961, %v615, %v1435
          %v1970 = vsel %vm1962, %v615, %v1435
          %v1971 = vsel %vm1963, %v615, %v1435
          %v1972 = vsel %vm1940, %v616, %v1964
          %v1973 = vsel %vm1941, %v617, %v1965
          %v1974 = vsel %vm1942, %v618, %v1966
          %v1975 = vsel %vm1943, %v619, %v1967
          %v1976 = vsel %vm1944, %v620, %v1968
          %v1977 = vsel %vm1945, %v621, %v1969
          %v1978 = vsel %vm1946, %v622, %v1970
          %v1979 = vsel %vm1947, %v623, %v1971
          %v1988 = vand.u32 %v1900, 1
          %v1989 = vand.u32 %v1901, 1
          %v1990 = vand.u32 %v1902, 1
          %v1991 = vand.u32 %v1903, 1
          %v1992 = vand.u32 %v1904, 1
          %v1993 = vand.u32 %v1905, 1
          %v1994 = vand.u32 %v1906, 1
          %v1995 = vand.u32 %v1907, 1
          %v1996 = vshll.u32 %v1988, 31
          %v1997 = vshll.u32 %v1989, 31
          %v1998 = vshll.u32 %v1990, 31
          %v1999 = vshll.u32 %v1991, 31
          %v2000 = vshll.u32 %v1992, 31
          %v2001 = vshll.u32 %v1993, 31
          %v2002 = vshll.u32 %v1994, 31
          %v2003 = vshll.u32 %v1995, 31
          %v2004 = vxor.u32 %v1924, %v1996
          %v2005 = vxor.u32 %v1925, %v1997
          %v2006 = vxor.u32 %v1926, %v1998
          %v2007 = vxor.u32 %v1927, %v1999
          %v2008 = vxor.u32 %v1928, %v2000
          %v2009 = vxor.u32 %v1929, %v2001
          %v2010 = vxor.u32 %v1930, %v2002
          %v2011 = vxor.u32 %v1931, %v2003
          %v2028 = vand.u32 %v1900, 2
          %v2029 = vand.u32 %v1901, 2
          %v2030 = vand.u32 %v1902, 2
          %v2031 = vand.u32 %v1903, 2
          %v2032 = vand.u32 %v1904, 2
          %v2033 = vand.u32 %v1905, 2
          %v2034 = vand.u32 %v1906, 2
          %v2035 = vand.u32 %v1907, 2
          %v2036 = vshll.u32 %v2028, 30
          %v2037 = vshll.u32 %v2029, 30
          %v2038 = vshll.u32 %v2030, 30
          %v2039 = vshll.u32 %v2031, 30
          %v2040 = vshll.u32 %v2032, 30
          %v2041 = vshll.u32 %v2033, 30
          %v2042 = vshll.u32 %v2034, 30
          %v2043 = vshll.u32 %v2035, 30
          %v2044 = vxor.u32 %v1972, %v2036
          %v2045 = vxor.u32 %v1973, %v2037
          %v2046 = vxor.u32 %v1974, %v2038
          %v2047 = vxor.u32 %v1975, %v2039
          %v2048 = vxor.u32 %v1976, %v2040
          %v2049 = vxor.u32 %v1977, %v2041
          %v2050 = vxor.u32 %v1978, %v2042
          %v2051 = vxor.u32 %v1979, %v2043
          %v2060 = vadd.f32 %v2004, %v2044
          %v2061 = vadd.f32 %v2005, %v2045
          %v2062 = vadd.f32 %v2006, %v2046
          %v2063 = vadd.f32 %v2007, %v2047
          %v2064 = vadd.f32 %v2008, %v2048
          %v2065 = vadd.f32 %v2009, %v2049
          %v2066 = vadd.f32 %v2010, %v2050
          %v2067 = vadd.f32 %v2011, %v2051
          %v2068 = vsub.f32 %v2060, %v1892
          %v2069 = vsub.f32 %v2061, %v1893
          %v2070 = vsub.f32 %v2062, %v1894
          %v2071 = vsub.f32 %v2063, %v1895
          %v2072 = vsub.f32 %v2064, %v1896
          %v2073 = vsub.f32 %v2065, %v1897
          %v2074 = vsub.f32 %v2066, %v1898
          %v2075 = vsub.f32 %v2067, %v1899
          %v2076 = vmul.f32 %v558, %v2068
          %v2077 = vmul.f32 %v558, %v2069
          %v2078 = vmul.f32 %v558, %v2070
          %v2079 = vmul.f32 %v558, %v2071
          %v2080 = vmul.f32 %v558, %v2072
          %v2081 = vmul.f32 %v558, %v2073
          %v2082 = vmul.f32 %v558, %v2074
          %v2083 = vmul.f32 %v558, %v2075
          %v2084 = vadd.f32 %v1892, %v2076
          %v2085 = vadd.f32 %v1893, %v2077
          %v2086 = vadd.f32 %v1894, %v2078
          %v2087 = vadd.f32 %v1895, %v2079
          %v2088 = vadd.f32 %v1896, %v2080
          %v2089 = vadd.f32 %v1897, %v2081
          %v2090 = vadd.f32 %v1898, %v2082
          %v2091 = vadd.f32 %v1899, %v2083
          %v2092 = vsub.f32 %v2084, %v1724
          %v2093 = vsub.f32 %v2085, %v1725
          %v2094 = vsub.f32 %v2086, %v1726
          %v2095 = vsub.f32 %v2087, %v1727
          %v2096 = vsub.f32 %v2088, %v1728
          %v2097 = vsub.f32 %v2089, %v1729
          %v2098 = vsub.f32 %v2090, %v1730
          %v2099 = vsub.f32 %v2091, %v1731
          %v2100 = vmul.f32 %v607, %v2092
          %v2101 = vmul.f32 %v608, %v2093
          %v2102 = vmul.f32 %v609, %v2094
          %v2103 = vmul.f32 %v610, %v2095
          %v2104 = vmul.f32 %v611, %v2096
          %v2105 = vmul.f32 %v612, %v2097
          %v2106 = vmul.f32 %v613, %v2098
          %v2107 = vmul.f32 %v614, %v2099
          %v2108 = vadd.f32 %v1724, %v2100
          %v2109 = vadd.f32 %v1725, %v2101
          %v2110 = vadd.f32 %v1726, %v2102
          %v2111 = vadd.f32 %v1727, %v2103
          %v2112 = vadd.f32 %v1728, %v2104
          %v2113 = vadd.f32 %v1729, %v2105
          %v2114 = vadd.f32 %v1730, %v2106
          %v2115 = vadd.f32 %v1731, %v2107
          %v2116 = vsub.f32 %v2108, %v1363
          %v2117 = vsub.f32 %v2109, %v1364
          %v2118 = vsub.f32 %v2110, %v1365
          %v2119 = vsub.f32 %v2111, %v1366
          %v2120 = vsub.f32 %v2112, %v1367
          %v2121 = vsub.f32 %v2113, %v1368
          %v2122 = vsub.f32 %v2114, %v1369
          %v2123 = vsub.f32 %v2115, %v1370
          %v2124 = vstv %s511
          %v2125 = vmul.f32 %v2124, %v2116
          %v2126 = vmul.f32 %v2124, %v2117
          %v2127 = vmul.f32 %v2124, %v2118
          %v2128 = vmul.f32 %v2124, %v2119
          %v2129 = vmul.f32 %v2124, %v2120
          %v2130 = vmul.f32 %v2124, %v2121
          %v2131 = vmul.f32 %v2124, %v2122
          %v2132 = vmul.f32 %v2124, %v2123
          %v2133 = vadd.f32 %v1363, %v2125
          %v2134 = vadd.f32 %v1364, %v2126
          %v2135 = vadd.f32 %v1365, %v2127
          %v2136 = vadd.f32 %v1366, %v2128
          %v2137 = vadd.f32 %v1367, %v2129
          %v2138 = vadd.f32 %v1368, %v2130
          %v2139 = vadd.f32 %v1369, %v2131
          %v2140 = vadd.f32 %v1370, %v2132
          %v2141 = vstv %s502
          %v2142 = vmul.f32 %v2133, %v2141
          %v2143 = vmul.f32 %v2134, %v2141
          %v2144 = vmul.f32 %v2135, %v2141
          %v2145 = vmul.f32 %v2136, %v2141
          %v2146 = vmul.f32 %v2137, %v2141
          %v2147 = vmul.f32 %v2138, %v2141
          %v2148 = vmul.f32 %v2139, %v2141
          %v2149 = vmul.f32 %v2140, %v2141
          %v2150 = vadd.f32 %v493, %v2142
          %v2151 = vadd.f32 %v494, %v2143
          %v2152 = vadd.f32 %v495, %v2144
          %v2153 = vadd.f32 %v496, %v2145
          %v2154 = vadd.f32 %v497, %v2146
          %v2155 = vadd.f32 %v498, %v2147
          %v2156 = vadd.f32 %v499, %v2148
          %v2157 = vadd.f32 %v500, %v2149
        $region73: #{tpu_custom_call.1} parent=43 // loop_footer
          %s492 = sadd.s32 1, %s488
        $region74: #{tpu_custom_call.1} parent=43 // loop_footer_branch
          %487 = sbr.rel target = $region70
        $region75: #{tpu_custom_call.1} parent=43 // loop_exit
          _
        %2158 = vst [vmem:[%s438] sm:$0xff] %v493
        %2159 = vst [vmem:[%s438 + $0x8] sm:$0xff] %v494
        %2160 = vst [vmem:[%s438 + $0x10] sm:$0xff] %v495
        %2161 = vst [vmem:[%s438 + $0x18] sm:$0xff] %v496
        %2162 = vst [vmem:[%s438 + $0x20] sm:$0xff] %v497
        %2163 = vst [vmem:[%s438 + $0x28] sm:$0xff] %v498
        %2164 = vst [vmem:[%s438 + $0x30] sm:$0xff] %v499
        %2165 = vst [vmem:[%s438 + $0x38] sm:$0xff] %v500
        %v2166 = vmin.f32 %v493, %v497
        %v2167 = vmin.f32 %v494, %v498
        %v2168 = vmin.f32 %v495, %v499
        %v2169 = vmin.f32 %v496, %v500
        %v2170 = vmin.f32 %v2166, %v2167
        %v2171 = vmin.f32 %v2168, %v2169
        %v2172 = vmin.f32 %v2170, %v2171
        %2173 = vmin.xlane.f32.xlu0 %v2172
        %v2174 = vpop.xlane.xlu0 %2173
        %v2175 = vrot.slane %v2174, 4
        %v2176 = vmin.f32 %v2174, %v2175
        %v2177 = vrot.slane %v2176, 2
        %v2178 = vmin.f32 %v2176, %v2177
        %v2179 = vrot.slane %v2178, 1
        %v2180 = vmin.f32 %v2178, %v2179
        %s2181 = vtos %v2180
        %v2182 = vmax.f32 %v493, %v497
        %v2183 = vmax.f32 %v494, %v498
        %v2184 = vmax.f32 %v495, %v499
        %v2185 = vmax.f32 %v496, %v500
        %v2186 = vmax.f32 %v2182, %v2183
        %v2187 = vmax.f32 %v2184, %v2185
        %v2188 = vmax.f32 %v2186, %v2187
        %2189 = vmax.xlane.f32.xlu0 %v2188
        %v2190 = vpop.xlane.xlu0 %2189
        %v2191 = vrot.slane %v2190, 4
        %v2192 = vmax.f32 %v2190, %v2191
        %v2193 = vrot.slane %v2192, 2
        %v2194 = vmax.f32 %v2192, %v2193
        %v2195 = vrot.slane %v2194, 1
        %v2196 = vmax.f32 %v2194, %v2195
        %s2197 = vtos %v2196
        %v2198 = vstv %s2181
        %2199 = vst [vmem:[%s445] sm:$0xff] %v2198
        %v2200 = vstv %s2197
        %2201 = vst [vmem:[%s452] sm:$0xff] %v2200
        %s2202 = sand.u32 %s187, 1
        %s2203 = scalar_lea.sflag [#allocation4], %s2202
        %s2204 = sand.u32 %s187, 1
        %s2205 = smul.addr %s2204, 64
        %s2206 = scalar_lea.vmem [#allocation13], %s2205
        %s2207 = sand.u32 %s32, 1
        %s2208 = scalar_lea.sflag [#allocation15], %s2207
        %s2209 = sand.u32 %s215, 1
        %s2210 = smul.addr %s2209, 8
        %s2211 = scalar_lea.vmem [#allocation14], %s2210
        %s2212 = sand.u32 %s32, 1
        %s2213 = scalar_lea.sflag [#allocation15], %s2212
        %s2214 = sand.u32 %s243, 1
        %s2215 = smul.addr %s2214, 8
        %s2216 = scalar_lea.vmem [#allocation16], %s2215
        // Predicated region
        $region76: #{tpu_custom_call.1} parent=43 // pred_check
          %p2217 = pneg %p197
        $region77: #{tpu_custom_call.1} parent=43 // pred_check_branch
          %2219 = sbr.rel (%p2217) target = $region79
        $region78: #{tpu_custom_call.1} parent=43 // pred_region
          %s2220 = smul.u32 8, %s37
          %s2222 = ssub.s32 1024, 1024
          %2223 = vsyncadd %s2203, %s2222
          %s2224 = smul.addr %s36, 8
          %s2225 = sadd.s32 %s2220, %s2224
          %s2226 = smul.addr %s2225, 128
          %s2227 = scalar_lea.hbm %s6, %s2226
          %s2228 = sshll.u32 %s2206, 4
          %s2229 = int_to_ptr.vmem [resolvable:$true] %s2228
          %2234 = dma.vmem_to_hbm [thread:$0]  %s2229, 1024, %s2227, %s2203, 128, 128, 8
        $region79: #{tpu_custom_call.1} parent=43 // pred_fallthru
          _
        // Predicated region
        $region80: #{tpu_custom_call.1} parent=43 // pred_check
          %p2235 = pneg %p225
        $region81: #{tpu_custom_call.1} parent=43 // pred_check_branch
          %2237 = sbr.rel (%p2235) target = $region83
        $region82: #{tpu_custom_call.1} parent=43 // pred_region
          %s2239 = ssub.s32 128, 128
          %2240 = vsyncadd %s2208, %s2239
          %s2241 = sadd.s32 %s37, %s36
          %s2242 = smul.addr %s2241, 128
          %s2243 = scalar_lea.hbm %s7, %s2242
          %s2245 = sshll.u32 %s2211, 4
          %s2246 = int_to_ptr.vmem [resolvable:$true] %s2245
          %2248 = dma.vmem_to_hbm [thread:$0]  %s2246, 128, %s2243, %s2208
        $region83: #{tpu_custom_call.1} parent=43 // pred_fallthru
          _
        // Predicated region
        $region84: #{tpu_custom_call.1} parent=43 // pred_check
          %p2249 = pneg %p253
        $region85: #{tpu_custom_call.1} parent=43 // pred_check_branch
          %2251 = sbr.rel (%p2249) target = $region87
        $region86: #{tpu_custom_call.1} parent=43 // pred_region
          %s2253 = ssub.s32 128, 128
          %2254 = vsyncadd %s2213, %s2253
          %s2255 = sadd.s32 %s37, %s36
          %s2256 = smul.addr %s2255, 128
          %s2257 = scalar_lea.hbm %s8, %s2256
          %s2259 = sshll.u32 %s2216, 4
          %s2260 = int_to_ptr.vmem [resolvable:$true] %s2259
          %2262 = dma.vmem_to_hbm [thread:$0]  %s2260, 128, %s2257, %s2213
        $region87: #{tpu_custom_call.1} parent=43 // pred_fallthru
          _
      $region44: #{tpu_custom_call.1} parent=5 // pred_fallthru
        _
      %p2263 = scmp.le.s32.totalorder 2, %s27
      // Predicated region
      $region88: #{tpu_custom_call.1} parent=5 // pred_check
        %p2264 = pneg %p2263
      $region89: #{tpu_custom_call.1} parent=5 // pred_check_branch
        %2266 = sbr.rel (%p2264) target = $region91
      $region90: #{tpu_custom_call.1} parent=5 // pred_region
        %s2267 = ssub.s32 %s27, 2
        // Predicated region
        $region92: #{tpu_custom_call.1} parent=90 // pred_check
          %p2268 = pneg %p203
        $region93: #{tpu_custom_call.1} parent=90 // pred_check_branch
          %2270 = sbr.rel (%p2268) target = $region95
        $region94: #{tpu_custom_call.1} parent=90 // pred_region
          %s2271 = sand.u32 %s188, 1
          %s2272 = scalar_lea.sflag [#allocation4], %s2271
          %s2273 = sand.u32 %s188, 1
          %s2274 = smul.addr %s2273, 64
          %s2275 = scalar_lea.vmem [#allocation13], %s2274
          %2276 = dma.done %s2272, 1024
        $region95: #{tpu_custom_call.1} parent=90 // pred_fallthru
          _
        // Predicated region
        $region96: #{tpu_custom_call.1} parent=90 // pred_check
          %p2277 = pneg %p231
        $region97: #{tpu_custom_call.1} parent=90 // pred_check_branch
          %2279 = sbr.rel (%p2277) target = $region99
        $region98: #{tpu_custom_call.1} parent=90 // pred_region
          %s2280 = sand.u32 %s33, 1
          %s2281 = scalar_lea.sflag [#allocation15], %s2280
          %s2282 = sand.u32 %s216, 1
          %s2283 = smul.addr %s2282, 8
          %s2284 = scalar_lea.vmem [#allocation14], %s2283
          %2285 = dma.done %s2281, 128
        $region99: #{tpu_custom_call.1} parent=90 // pred_fallthru
          _
        // Predicated region
        $region100: #{tpu_custom_call.1} parent=90 // pred_check
          %p2286 = pneg %p259
        $region101: #{tpu_custom_call.1} parent=90 // pred_check_branch
          %2288 = sbr.rel (%p2286) target = $region103
        $region102: #{tpu_custom_call.1} parent=90 // pred_region
          %s2289 = sand.u32 %s33, 1
          %s2290 = scalar_lea.sflag [#allocation15], %s2289
          %s2291 = sand.u32 %s244, 1
          %s2292 = smul.addr %s2291, 8
          %s2293 = scalar_lea.vmem [#allocation16], %s2292
          %2294 = dma.done %s2290, 128
        $region103: #{tpu_custom_call.1} parent=90 // pred_fallthru
          _
      $region91: #{tpu_custom_call.1} parent=5 // pred_fallthru
        _
    $region6: #{tpu_custom_call.1} parent=1 // loop_footer
      %s31 = sadd.s32 1, %s27
    $region7: #{tpu_custom_call.1} parent=1 // loop_footer_branch
      %26 = sbr.rel target = $region3
    $region8: #{tpu_custom_call.1} parent=1 // loop_exit
      _
    %2295 = vsyncpa [#allocation3], 1
    %s2296 = scalar_lea.sflag [#allocation3], 1
    %2297 = vsyncpa %s2296, 1
    %2298 = vsyncpa [#allocation4], 1
    %s2299 = scalar_lea.sflag [#allocation4], 1
    %2300 = vsyncpa %s2299, 1
    %2301 = vsyncpa [#allocation15], 1
    %s2302 = scalar_lea.sflag [#allocation15], 1
    %2303 = vsyncpa %s2302, 1
    %2304 = vsyncpa [#allocation5], 1
    %s2305 = scalar_lea.sflag [#allocation5], 1
    %2306 = vsyncpa %s2305, 1
    %2307 = vsyncpa [#allocation7], 1
    %2308 = vsyncpa [#allocation10], 1

</llo_original>
